<compile_context>
chip_gen: v6e
topology: v6e:2x2x1
jax: 0.10.0
libtpu: 0.0.40
codegen_flags: <defaults>
</compile_context>

<pallas_src>
import jax
import jax.numpy as jnp
from jax.experimental import pallas as pl
from jax.experimental.pallas import tpu as pltpu


K_PAD = 896     # 784 padded up to 7 * 128 (lane-aligned contraction dim)
H4_PAD = 128    # layer-4 width 64 padded to one full lane group
OUT_PAD = 128   # 10 logits padded to one full lane group (unmasked stores)


def mlp_kernel(x_ref,
               w1_ref, b1_ref,
               w2_ref, b2_ref,
               w3_ref, b3_ref,
               w4_ref, b4_ref,
               w5_ref, b5_ref,
               o_ref):
    """Fused 5-layer MLP on one batch tile: bf16 MXU matmuls, f32 accumulation,
    bias + ReLU on the VPU. x arrives already in bf16."""
    h = x_ref[...]  # bf16 tile, streamed per grid step

    h = jnp.dot(h, w1_ref[...], preferred_element_type=jnp.float32) + b1_ref[...]
    h = jnp.maximum(h, 0.0).astype(jnp.bfloat16)

    h = jnp.dot(h, w2_ref[...], preferred_element_type=jnp.float32) + b2_ref[...]
    h = jnp.maximum(h, 0.0).astype(jnp.bfloat16)

    h = jnp.dot(h, w3_ref[...], preferred_element_type=jnp.float32) + b3_ref[...]
    h = jnp.maximum(h, 0.0).astype(jnp.bfloat16)

    h = jnp.dot(h, w4_ref[...], preferred_element_type=jnp.float32) + b4_ref[...]
    h = jnp.maximum(h, 0.0).astype(jnp.bfloat16)

    h = jnp.dot(h, w5_ref[...], preferred_element_type=jnp.float32) + b5_ref[...]

    o_ref[...] = h.astype(o_ref.dtype)


def _round_up(n, m):
    return (n + m - 1) // m * m


def prepare_params(params):
    """One-time weight preprocessing (cast + pad). Call once at init, not per
    forward: avoids ~1.3 MB of per-call pad/cast HBM traffic in the wrapper.

    params: list of (W (in,out) f32, b (1,out) f32) for the 5 layers.
    Returns the flat tuple of kernel-ready arrays.
    """
    (w1, b1), (w2, b2), (w3, b3), (w4, b4), (w5, b5) = params

    # Layer 1: pad contraction dim 784 -> 896 (zero rows contribute nothing).
    w1p = jnp.zeros((K_PAD, 512), jnp.bfloat16).at[:784, :].set(w1.astype(jnp.bfloat16))

    # Layer 4: pad output 64 -> 128 lanes (zero cols / zero bias entries);
    # ReLU of the padded lanes is 0 and feeds zero rows of w5 below.
    w4p = jnp.zeros((128, H4_PAD), jnp.bfloat16).at[:, :64].set(w4.astype(jnp.bfloat16))
    b4p = jnp.zeros((1, H4_PAD), jnp.float32).at[:, :64].set(b4)

    # Layer 5: pad contraction 64 -> 128 (zero rows) and output 10 -> 128
    # lanes (zero cols / zero bias), so the output store is lane-dense.
    w5p = jnp.zeros((H4_PAD, OUT_PAD), jnp.bfloat16).at[:64, :10].set(w5.astype(jnp.bfloat16))
    b5p = jnp.zeros((1, OUT_PAD), jnp.float32).at[:, :10].set(b5)

    return (
        w1p, b1,
        w2.astype(jnp.bfloat16), b2,
        w3.astype(jnp.bfloat16), b3,
        w4p, b4p,
        w5p, b5p,
    )


def mlp_forward(x_nchw, prepped, *, tm=256):
    """x_nchw: (B, 1, 28, 28) float32. prepped: output of prepare_params()."""
    B = x_nchw.shape[0]
    x = x_nchw.reshape(B, 784)  # mirrors x.view(-1, 784)

    # Batch tile: default 256 (fills 256-tall MXU on v6e/v7x), sublane-aligned
    # fallback for tiny batches.
    tm = min(tm, _round_up(B, 8))
    b_pad = _round_up(B, tm)
    # Prefer >= 2 grid steps when the batch is large enough (keeps both
    # TensorCores busy on v7x); each tile stays >= 128 rows.
    while b_pad // tm < 2 and tm >= 256:
        tm //= 2
        b_pad = _round_up(B, tm)

    # Pad batch rows and the 784 feature dim to 896, casting to bf16 here so
    # the kernel streams half the bytes per row. Zero rows/cols of the padded
    # first-layer weight contribute nothing, so numerics are unchanged.
    x_p = jnp.zeros((b_pad, K_PAD), jnp.bfloat16).at[:B, :784].set(x.astype(jnp.bfloat16))

    flat_args = [x_p, *prepped]

    # Activations/outputs stream per batch tile; weights & biases use constant
    # index_maps (same block every grid step) so they remain VMEM-resident and
    # are DMA'd once.
    in_specs = [pl.BlockSpec((tm, K_PAD), lambda m: (m, 0))]
    for a in flat_args[1:]:
        in_specs.append(pl.BlockSpec(a.shape, lambda m: (0, 0)))

    out = pl.pallas_call(
        mlp_kernel,
        grid=(b_pad // tm,),
        in_specs=in_specs,
        out_specs=pl.BlockSpec((tm, OUT_PAD), lambda m: (m, 0)),
        out_shape=jax.ShapeDtypeStruct((b_pad, OUT_PAD), jnp.float32),
        compiler_params=pltpu.CompilerParams(
            dimension_semantics=("parallel",),     # shard batch tiles across TCs (v7x)
            vmem_limit_bytes=32 * 1024 * 1024,
        ),
    )(*flat_args)

    # Drop batch padding and the padded logit lanes.
    return out[:B, :10]


def init_params(key):
    """Deterministic init mimicking PyTorch Linear default (uniform +/- 1/sqrt(fan_in))."""
    sizes = [(784, 512), (512, 256), (256, 128), (128, 64), (64, 10)]
    params = []
    for (fan_in, fan_out) in sizes:
        key, kw, kb = jax.random.split(key, 3)
        bound = 1.0 / jnp.sqrt(jnp.float32(fan_in))
        w = jax.random.uniform(kw, (fan_in, fan_out), jnp.float32, -bound, bound)
        b = jax.random.uniform(kb, (1, fan_out), jnp.float32, -bound, bound)
        params.append((w, b))
    return params


def reference_forward(x_nchw, params):
    """Pure-JAX reference using the same bf16-input / bf16-weight / f32-accumulate recipe."""
    h = x_nchw.reshape(x_nchw.shape[0], 784)
    n = len(params)
    for i, (w, b) in enumerate(params):
        h = jnp.dot(h.astype(jnp.bfloat16), w.astype(jnp.bfloat16),
                    preferred_element_type=jnp.float32) + b
        if i < n - 1:
            h = jnp.maximum(h, 0.0)
    return h


if __name__ == "__main__":
    key = jax.random.PRNGKey(0)
    key, kx = jax.random.split(key)

    B = 8  # small batch
    x = jax.random.normal(kx, (B, 1, 28, 28), jnp.float32)  # NCHW like MNIST
    params = init_params(key)

    # One-time weight preprocessing (hoisted out of the per-call path).
    prepped = jax.block_until_ready(prepare_params(params))

    out = mlp_forward(x, prepped)
    out = jax.block_until_ready(out)

    ref = reference_forward(x, params)
    assert out.shape == (B, 10), out.shape
    assert jnp.allclose(out, ref, atol=1e-2, rtol=1e-2), "mismatch vs reference"

    print("KERNEL_OK")
</pallas_src>

<mosaic_0001>
module attributes {stable_mosaic.version = 11 : i64} {
  func.func @mlp_kernel(%arg0: i32, %arg1: memref<8x896xbf16, #tpu.memory_space<vmem>>, %arg2: memref<896x512xbf16, #tpu.memory_space<vmem>>, %arg3: memref<1x512xf32, #tpu.memory_space<vmem>>, %arg4: memref<512x256xbf16, #tpu.memory_space<vmem>>, %arg5: memref<1x256xf32, #tpu.memory_space<vmem>>, %arg6: memref<256x128xbf16, #tpu.memory_space<vmem>>, %arg7: memref<1x128xf32, #tpu.memory_space<vmem>>, %arg8: memref<128x128xbf16, #tpu.memory_space<vmem>>, %arg9: memref<1x128xf32, #tpu.memory_space<vmem>>, %arg10: memref<128x128xbf16, #tpu.memory_space<vmem>>, %arg11: memref<1x128xf32, #tpu.memory_space<vmem>>, %arg12: memref<8x128xf32, #tpu.memory_space<vmem>>) attributes {dimension_semantics = [#tpu.dimension_semantics<parallel>], iteration_bounds = array<i64: 1>, scalar_prefetch = 0 : i64, scratch_operands = 0 : i64, tpu.core_type = #tpu.core_type<tc>, window_params = [{transform_indices = @transform_0, window_bounds = array<i64: 8, 896>}, {pipeline_mode = #tpu.pipeline_mode<synchronous>, transform_indices = @transform_1, window_bounds = array<i64: 896, 512>}, {pipeline_mode = #tpu.pipeline_mode<synchronous>, transform_indices = @transform_2, window_bounds = array<i64: 1, 512>}, {pipeline_mode = #tpu.pipeline_mode<synchronous>, transform_indices = @transform_3, window_bounds = array<i64: 512, 256>}, {pipeline_mode = #tpu.pipeline_mode<synchronous>, transform_indices = @transform_4, window_bounds = array<i64: 1, 256>}, {pipeline_mode = #tpu.pipeline_mode<synchronous>, transform_indices = @transform_5, window_bounds = array<i64: 256, 128>}, {pipeline_mode = #tpu.pipeline_mode<synchronous>, transform_indices = @transform_6, window_bounds = array<i64: 1, 128>}, {pipeline_mode = #tpu.pipeline_mode<synchronous>, transform_indices = @transform_7, window_bounds = array<i64: 128, 128>}, {pipeline_mode = #tpu.pipeline_mode<synchronous>, transform_indices = @transform_8, window_bounds = array<i64: 1, 128>}, {pipeline_mode = #tpu.pipeline_mode<synchronous>, transform_indices = @transform_9, window_bounds = array<i64: 128, 128>}, {pipeline_mode = #tpu.pipeline_mode<synchronous>, transform_indices = @transform_10, window_bounds = array<i64: 1, 128>}, {transform_indices = @transform_11, window_bounds = array<i64: 8, 128>}]} {
    %c0 = arith.constant 0 : index
    %c0_0 = arith.constant 0 : index
    %0 = vector.load %arg1[%c0, %c0_0] : memref<8x896xbf16, #tpu.memory_space<vmem>>, vector<8x896xbf16>
    %c0_1 = arith.constant 0 : index
    %c0_2 = arith.constant 0 : index
    %1 = vector.load %arg2[%c0_1, %c0_2] : memref<896x512xbf16, #tpu.memory_space<vmem>>, vector<896x512xbf16>
    %cst = arith.constant dense<0.000000e+00> : vector<8x512xf32>
    %2 = tpu.matmul %0, %1, %cst {dimension_numbers = #tpu.dot_dimension_numbers<[1], [0], [0], [1], [0, 0, 1, 1], [], []>} : vector<8x896xbf16>, vector<896x512xbf16>, vector<8x512xf32> -> vector<8x512xf32>
    %c0_3 = arith.constant 0 : index
    %c0_4 = arith.constant 0 : index
    %3 = vector.load %arg3[%c0_3, %c0_4] : memref<1x512xf32, #tpu.memory_space<vmem>>, vector<1x512xf32>
    %4 = vector.broadcast %3 : vector<1x512xf32> to vector<8x512xf32>
    %5 = arith.addf %2, %4 : vector<8x512xf32>
    %cst_5 = arith.constant 0.000000e+00 : f32
    %6 = vector.broadcast %cst_5 : f32 to vector<8x512xf32>
    %7 = arith.maximumf %5, %6 : vector<8x512xf32>
    %8 = arith.truncf %7 : vector<8x512xf32> to vector<8x512xbf16>
    %c0_6 = arith.constant 0 : index
    %c0_7 = arith.constant 0 : index
    %9 = vector.load %arg4[%c0_6, %c0_7] : memref<512x256xbf16, #tpu.memory_space<vmem>>, vector<512x256xbf16>
    %cst_8 = arith.constant dense<0.000000e+00> : vector<8x256xf32>
    %10 = tpu.matmul %8, %9, %cst_8 {dimension_numbers = #tpu.dot_dimension_numbers<[1], [0], [0], [1], [0, 0, 1, 1], [], []>} : vector<8x512xbf16>, vector<512x256xbf16>, vector<8x256xf32> -> vector<8x256xf32>
    %c0_9 = arith.constant 0 : index
    %c0_10 = arith.constant 0 : index
    %11 = vector.load %arg5[%c0_9, %c0_10] : memref<1x256xf32, #tpu.memory_space<vmem>>, vector<1x256xf32>
    %12 = vector.broadcast %11 : vector<1x256xf32> to vector<8x256xf32>
    %13 = arith.addf %10, %12 : vector<8x256xf32>
    %cst_11 = arith.constant 0.000000e+00 : f32
    %14 = vector.broadcast %cst_11 : f32 to vector<8x256xf32>
    %15 = arith.maximumf %13, %14 : vector<8x256xf32>
    %16 = arith.truncf %15 : vector<8x256xf32> to vector<8x256xbf16>
    %c0_12 = arith.constant 0 : index
    %c0_13 = arith.constant 0 : index
    %17 = vector.load %arg6[%c0_12, %c0_13] : memref<256x128xbf16, #tpu.memory_space<vmem>>, vector<256x128xbf16>
    %cst_14 = arith.constant dense<0.000000e+00> : vector<8x128xf32>
    %18 = tpu.matmul %16, %17, %cst_14 {dimension_numbers = #tpu.dot_dimension_numbers<[1], [0], [0], [1], [0, 0, 1, 1], [], []>} : vector<8x256xbf16>, vector<256x128xbf16>, vector<8x128xf32> -> vector<8x128xf32>
    %c0_15 = arith.constant 0 : index
    %c0_16 = arith.constant 0 : index
    %19 = vector.load %arg7[%c0_15, %c0_16] : memref<1x128xf32, #tpu.memory_space<vmem>>, vector<1x128xf32>
    %20 = vector.broadcast %19 : vector<1x128xf32> to vector<8x128xf32>
    %21 = arith.addf %18, %20 : vector<8x128xf32>
    %cst_17 = arith.constant 0.000000e+00 : f32
    %22 = vector.broadcast %cst_17 : f32 to vector<8x128xf32>
    %23 = arith.maximumf %21, %22 : vector<8x128xf32>
    %24 = arith.truncf %23 : vector<8x128xf32> to vector<8x128xbf16>
    %c0_18 = arith.constant 0 : index
    %c0_19 = arith.constant 0 : index
    %25 = vector.load %arg8[%c0_18, %c0_19] : memref<128x128xbf16, #tpu.memory_space<vmem>>, vector<128x128xbf16>
    %cst_20 = arith.constant dense<0.000000e+00> : vector<8x128xf32>
    %26 = tpu.matmul %24, %25, %cst_20 {dimension_numbers = #tpu.dot_dimension_numbers<[1], [0], [0], [1], [0, 0, 1, 1], [], []>} : vector<8x128xbf16>, vector<128x128xbf16>, vector<8x128xf32> -> vector<8x128xf32>
    %c0_21 = arith.constant 0 : index
    %c0_22 = arith.constant 0 : index
    %27 = vector.load %arg9[%c0_21, %c0_22] : memref<1x128xf32, #tpu.memory_space<vmem>>, vector<1x128xf32>
    %28 = vector.broadcast %27 : vector<1x128xf32> to vector<8x128xf32>
    %29 = arith.addf %26, %28 : vector<8x128xf32>
    %cst_23 = arith.constant 0.000000e+00 : f32
    %30 = vector.broadcast %cst_23 : f32 to vector<8x128xf32>
    %31 = arith.maximumf %29, %30 : vector<8x128xf32>
    %32 = arith.truncf %31 : vector<8x128xf32> to vector<8x128xbf16>
    %c0_24 = arith.constant 0 : index
    %c0_25 = arith.constant 0 : index
    %33 = vector.load %arg10[%c0_24, %c0_25] : memref<128x128xbf16, #tpu.memory_space<vmem>>, vector<128x128xbf16>
    %cst_26 = arith.constant dense<0.000000e+00> : vector<8x128xf32>
    %34 = tpu.matmul %32, %33, %cst_26 {dimension_numbers = #tpu.dot_dimension_numbers<[1], [0], [0], [1], [0, 0, 1, 1], [], []>} : vector<8x128xbf16>, vector<128x128xbf16>, vector<8x128xf32> -> vector<8x128xf32>
    %c0_27 = arith.constant 0 : index
    %c0_28 = arith.constant 0 : index
    %35 = vector.load %arg11[%c0_27, %c0_28] : memref<1x128xf32, #tpu.memory_space<vmem>>, vector<1x128xf32>
    %36 = vector.broadcast %35 : vector<1x128xf32> to vector<8x128xf32>
    %37 = arith.addf %34, %36 : vector<8x128xf32>
    %c0_29 = arith.constant 0 : index
    %c0_30 = arith.constant 0 : index
    %38 = vector.load %arg12[%c0_29, %c0_30] : memref<8x128xf32, #tpu.memory_space<vmem>>, vector<8x128xf32>
    tpu.vector_store %arg12[%c0_29, %c0_30], %37 {strides = array<i32>} : memref<8x128xf32, #tpu.memory_space<vmem>>, vector<8x128xf32>,
    return
  }
  func.func @transform_0(%arg0: i32) -> (i32, i32) {
    %c0_i32 = arith.constant 0 : i32
    %c0_i32_0 = arith.constant 0 : i32
    return %arg0, %c0_i32 : i32, i32
  }
  func.func @transform_1(%arg0: i32) -> (i32, i32) {
    %c0_i32 = arith.constant 0 : i32
    %c0_i32_0 = arith.constant 0 : i32
    %c0_i32_1 = arith.constant 0 : i32
    return %c0_i32, %c0_i32_0 : i32, i32
  }
  func.func @transform_2(%arg0: i32) -> (i32, i32) {
    %c0_i32 = arith.constant 0 : i32
    %c0_i32_0 = arith.constant 0 : i32
    %c0_i32_1 = arith.constant 0 : i32
    return %c0_i32, %c0_i32_0 : i32, i32
  }
  func.func @transform_3(%arg0: i32) -> (i32, i32) {
    %c0_i32 = arith.constant 0 : i32
    %c0_i32_0 = arith.constant 0 : i32
    %c0_i32_1 = arith.constant 0 : i32
    return %c0_i32, %c0_i32_0 : i32, i32
  }
  func.func @transform_4(%arg0: i32) -> (i32, i32) {
    %c0_i32 = arith.constant 0 : i32
    %c0_i32_0 = arith.constant 0 : i32
    %c0_i32_1 = arith.constant 0 : i32
    return %c0_i32, %c0_i32_0 : i32, i32
  }
  func.func @transform_5(%arg0: i32) -> (i32, i32) {
    %c0_i32 = arith.constant 0 : i32
    %c0_i32_0 = arith.constant 0 : i32
    %c0_i32_1 = arith.constant 0 : i32
    return %c0_i32, %c0_i32_0 : i32, i32
  }
  func.func @transform_6(%arg0: i32) -> (i32, i32) {
    %c0_i32 = arith.constant 0 : i32
    %c0_i32_0 = arith.constant 0 : i32
    %c0_i32_1 = arith.constant 0 : i32
    return %c0_i32, %c0_i32_0 : i32, i32
  }
  func.func @transform_7(%arg0: i32) -> (i32, i32) {
    %c0_i32 = arith.constant 0 : i32
    %c0_i32_0 = arith.constant 0 : i32
    %c0_i32_1 = arith.constant 0 : i32
    return %c0_i32, %c0_i32_0 : i32, i32
  }
  func.func @transform_8(%arg0: i32) -> (i32, i32) {
    %c0_i32 = arith.constant 0 : i32
    %c0_i32_0 = arith.constant 0 : i32
    %c0_i32_1 = arith.constant 0 : i32
    return %c0_i32, %c0_i32_0 : i32, i32
  }
  func.func @transform_9(%arg0: i32) -> (i32, i32) {
    %c0_i32 = arith.constant 0 : i32
    %c0_i32_0 = arith.constant 0 : i32
    %c0_i32_1 = arith.constant 0 : i32
    return %c0_i32, %c0_i32_0 : i32, i32
  }
  func.func @transform_10(%arg0: i32) -> (i32, i32) {
    %c0_i32 = arith.constant 0 : i32
    %c0_i32_0 = arith.constant 0 : i32
    %c0_i32_1 = arith.constant 0 : i32
    return %c0_i32, %c0_i32_0 : i32, i32
  }
  func.func @transform_11(%arg0: i32) -> (i32, i32) {
    %c0_i32 = arith.constant 0 : i32
    %c0_i32_0 = arith.constant 0 : i32
    return %arg0, %c0_i32 : i32, i32
  }
}

</mosaic_0001>

<llo_original>
// kernel: tpu_custom_call.1
$region0: #{tpu_custom_call.1}
  #allocation0 [shape = 'u32[]', space=smem, size = 0x4, offset = 0x4, fixed_abs, tag = 'smem constant byte address 0x4 - core index']
  #allocation1 [shape = 'u32[144,128]{1,0:T(1,128)}', space=vmem, size = 0x12000, scoped, tag = 'internal scratch']
  %s0 = inlined_call_operand.hbm [shape: bf16[8,896], index: 0, kind: input, shape index: {}]
  %s1 = inlined_call_operand.hbm [shape: bf16[896,512], index: 1, kind: input, shape index: {}]
  %s2 = inlined_call_operand.hbm [shape: f32[1,512], index: 2, kind: input, shape index: {}]
  %s3 = inlined_call_operand.hbm [shape: bf16[512,256], index: 3, kind: input, shape index: {}]
  %s4 = inlined_call_operand.vmem [shape: f32[1,256], index: 4, kind: input, shape index: {}]
  %s5 = inlined_call_operand.hbm [shape: bf16[256,128], index: 5, kind: input, shape index: {}]
  %s6 = inlined_call_operand.vmem [shape: f32[1,128], index: 6, kind: input, shape index: {}]
  %s7 = inlined_call_operand.hbm [shape: bf16[128,128], index: 7, kind: input, shape index: {}]
  %s8 = inlined_call_operand.vmem [shape: f32[1,128], index: 8, kind: input, shape index: {}]
  %s9 = inlined_call_operand.hbm [shape: bf16[128,128], index: 9, kind: input, shape index: {}]
  %s10 = inlined_call_operand.vmem [shape: f32[1,128], index: 10, kind: input, shape index: {}]
  %s11 = inlined_call_operand.hbm [shape: f32[8,128], index: 11, kind: output, shape index: {}]
  %s12 = sld [smem:[#allocation0]]
  $region82: #{tpu_custom_call.1} parent=0
    _
  %s14 = ssub.s32 1, %s12
  %s15 = scalar_select 0, %s14, %s12
  $region1: #{tpu_custom_call.1} parent=0
    #allocation2 [shape = 'u8[14336]{0}', space=vmem, size = 0x3800, scoped, tag = 'input window, operand 0, single buffered']
    #allocation3 [shape = 's32[1]{0}', space=sflag, size = 0x4, scoped, tag = 'scoped memory for tpu_custom_call.1']
    #allocation4 [shape = 's32[1]{0}', space=sflag, size = 0x4, scoped, tag = 'scoped memory for tpu_custom_call.1']
    #allocation5 [shape = 'u8[917504]{0}', space=vmem, size = 0xe0000, scoped, tag = 'input window, operand 1, single buffered']
    #allocation6 [shape = 's32[1]{0}', space=sflag, size = 0x4, scoped, tag = 'scoped memory for tpu_custom_call.1']
    #allocation7 [shape = 'u8[2048]{0}', space=vmem, size = 0x800, scoped, tag = 'input window, operand 2, single buffered']
    #allocation8 [shape = 'u8[262144]{0}', space=vmem, size = 0x40000, scoped, tag = 'input window, operand 3, single buffered']
    #allocation9 [shape = 's32[1]{0}', space=sflag, size = 0x4, scoped, tag = 'scoped memory for tpu_custom_call.1']
    #allocation10 [shape = 'u8[65536]{0}', space=vmem, size = 0x10000, scoped, tag = 'input window, operand 5, single buffered']
    #allocation11 [shape = 'u8[32768]{0}', space=vmem, size = 0x8000, scoped, tag = 'input window, operand 7, single buffered']
    #allocation12 [shape = 's32[1]{0}', space=sflag, size = 0x4, scoped, tag = 'scoped memory for tpu_custom_call.1']
    #allocation13 [shape = 'u8[32768]{0}', space=vmem, size = 0x8000, scoped, tag = 'input window, operand 9, single buffered']
    #allocation14 [shape = 'u8[4096]{0}', space=vmem, size = 0x1000, scoped, tag = 'output window, operand 0, single buffered']
    %16 = vsyncpa [#allocation3], 0
    %17 = vsyncpa [#allocation6], 0
    %18 = vsyncpa [#allocation9], 0
    %19 = vsyncpa [#allocation12], 0
    %20 = vsyncpa [#allocation4], 0
    // Predicated region
    $region2: #{tpu_custom_call.1} parent=1 // pred_check
      _
    $region3: #{tpu_custom_call.1} parent=1 // pred_check_branch
      %22 = sbr.rel (0) target = $region5
    $region4: #{tpu_custom_call.1} parent=1 // pred_region
      %s24 = ssub.s32 448, 448
      %25 = vsyncadd [#allocation3], %s24
      %s27 = sshll.u32 [#allocation2], 4
      %s28 = int_to_ptr.vmem [resolvable:$true] %s27
      %30 = dma.hbm_to_vmem [thread:$0]  %s0, 448, %s28, [#allocation3]
    $region5: #{tpu_custom_call.1} parent=1 // pred_fallthru
      _
    // Predicated region
    $region6: #{tpu_custom_call.1} parent=1 // pred_check
      _
    $region7: #{tpu_custom_call.1} parent=1 // pred_check_branch
      %32 = sbr.rel (0) target = $region9
    $region8: #{tpu_custom_call.1} parent=1 // pred_region
      %s34 = ssub.s32 28672, 28672
      %35 = vsyncadd [#allocation6], %s34
      %s36 = sshll.u32 [#allocation5], 4
      %s37 = int_to_ptr.vmem [resolvable:$true] %s36
      %42 = dma.hbm_to_vmem [thread:$0]  %s1, 28672, %s37, [#allocation6], 256, 256, 16
    $region9: #{tpu_custom_call.1} parent=1 // pred_fallthru
      _
    // Predicated region
    $region10: #{tpu_custom_call.1} parent=1 // pred_check
      _
    $region11: #{tpu_custom_call.1} parent=1 // pred_check_branch
      %44 = sbr.rel (0) target = $region13
    $region12: #{tpu_custom_call.1} parent=1 // pred_region
      %s46 = ssub.s32 64, 64
      %47 = vsyncadd [#allocation6], %s46
      %s49 = sshll.u32 [#allocation7], 4
      %s50 = int_to_ptr.vmem [resolvable:$true] %s49
      %52 = dma.hbm_to_vmem [thread:$0]  %s2, 64, %s50, [#allocation6]
    $region13: #{tpu_custom_call.1} parent=1 // pred_fallthru
      _
    // Predicated region
    $region14: #{tpu_custom_call.1} parent=1 // pred_check
      _
    $region15: #{tpu_custom_call.1} parent=1 // pred_check_branch
      %54 = sbr.rel (0) target = $region17
    $region16: #{tpu_custom_call.1} parent=1 // pred_region
      %s56 = ssub.s32 8192, 8192
      %57 = vsyncadd [#allocation9], %s56
      %s58 = sshll.u32 [#allocation8], 4
      %s59 = int_to_ptr.vmem [resolvable:$true] %s58
      %64 = dma.hbm_to_vmem [thread:$0]  %s3, 8192, %s59, [#allocation9], 128, 128, 8
    $region17: #{tpu_custom_call.1} parent=1 // pred_fallthru
      _
    // Predicated region
    $region18: #{tpu_custom_call.1} parent=1 // pred_check
      _
    $region19: #{tpu_custom_call.1} parent=1 // pred_check_branch
      %66 = sbr.rel (0) target = $region21
    $region20: #{tpu_custom_call.1} parent=1 // pred_region
      _
    $region21: #{tpu_custom_call.1} parent=1 // pred_fallthru
      _
    // Predicated region
    $region22: #{tpu_custom_call.1} parent=1 // pred_check
      _
    $region23: #{tpu_custom_call.1} parent=1 // pred_check_branch
      %68 = sbr.rel (0) target = $region25
    $region24: #{tpu_custom_call.1} parent=1 // pred_region
      %s70 = ssub.s32 2048, 2048
      %71 = vsyncadd [#allocation9], %s70
      %s72 = sshll.u32 [#allocation10], 4
      %s73 = int_to_ptr.vmem [resolvable:$true] %s72
      %78 = dma.hbm_to_vmem [thread:$0]  %s5, 2048, %s73, [#allocation9], 64, 64, 4
    $region25: #{tpu_custom_call.1} parent=1 // pred_fallthru
      _
    // Predicated region
    $region26: #{tpu_custom_call.1} parent=1 // pred_check
      _
    $region27: #{tpu_custom_call.1} parent=1 // pred_check_branch
      %80 = sbr.rel (0) target = $region29
    $region28: #{tpu_custom_call.1} parent=1 // pred_region
      _
    $region29: #{tpu_custom_call.1} parent=1 // pred_fallthru
      _
    // Predicated region
    $region30: #{tpu_custom_call.1} parent=1 // pred_check
      _
    $region31: #{tpu_custom_call.1} parent=1 // pred_check_branch
      %82 = sbr.rel (0) target = $region33
    $region32: #{tpu_custom_call.1} parent=1 // pred_region
      %s84 = ssub.s32 1024, 1024
      %85 = vsyncadd [#allocation12], %s84
      %s86 = sshll.u32 [#allocation11], 4
      %s87 = int_to_ptr.vmem [resolvable:$true] %s86
      %92 = dma.hbm_to_vmem [thread:$0]  %s7, 1024, %s87, [#allocation12], 64, 64, 4
    $region33: #{tpu_custom_call.1} parent=1 // pred_fallthru
      _
    // Predicated region
    $region34: #{tpu_custom_call.1} parent=1 // pred_check
      _
    $region35: #{tpu_custom_call.1} parent=1 // pred_check_branch
      %94 = sbr.rel (0) target = $region37
    $region36: #{tpu_custom_call.1} parent=1 // pred_region
      _
    $region37: #{tpu_custom_call.1} parent=1 // pred_fallthru
      _
    // Predicated region
    $region38: #{tpu_custom_call.1} parent=1 // pred_check
      _
    $region39: #{tpu_custom_call.1} parent=1 // pred_check_branch
      %96 = sbr.rel (0) target = $region41
    $region40: #{tpu_custom_call.1} parent=1 // pred_region
      %s98 = ssub.s32 1024, 1024
      %99 = vsyncadd [#allocation12], %s98
      %s100 = sshll.u32 [#allocation13], 4
      %s101 = int_to_ptr.vmem [resolvable:$true] %s100
      %106 = dma.hbm_to_vmem [thread:$0]  %s9, 1024, %s101, [#allocation12], 64, 64, 4
    $region41: #{tpu_custom_call.1} parent=1 // pred_fallthru
      _
    // Predicated region
    $region42: #{tpu_custom_call.1} parent=1 // pred_check
      _
    $region43: #{tpu_custom_call.1} parent=1 // pred_check_branch
      %108 = sbr.rel (0) target = $region45
    $region44: #{tpu_custom_call.1} parent=1 // pred_region
      _
    $region45: #{tpu_custom_call.1} parent=1 // pred_fallthru
      _
    // Predicated region
    $region46: #{tpu_custom_call.1} parent=1 // pred_check
      _
    $region47: #{tpu_custom_call.1} parent=1 // pred_check_branch
      %110 = sbr.rel (0) target = $region49
    $region48: #{tpu_custom_call.1} parent=1 // pred_region
      %111 = dma.done [#allocation3], 448
    $region49: #{tpu_custom_call.1} parent=1 // pred_fallthru
      _
    // Predicated region
    $region50: #{tpu_custom_call.1} parent=1 // pred_check
      _
    $region51: #{tpu_custom_call.1} parent=1 // pred_check_branch
      %113 = sbr.rel (0) target = $region53
    $region52: #{tpu_custom_call.1} parent=1 // pred_region
      %114 = dma.done [#allocation6], 28672
    $region53: #{tpu_custom_call.1} parent=1 // pred_fallthru
      _
    // Predicated region
    $region54: #{tpu_custom_call.1} parent=1 // pred_check
      _
    $region55: #{tpu_custom_call.1} parent=1 // pred_check_branch
      %116 = sbr.rel (0) target = $region57
    $region56: #{tpu_custom_call.1} parent=1 // pred_region
      %117 = dma.done [#allocation6], 64
    $region57: #{tpu_custom_call.1} parent=1 // pred_fallthru
      _
    // Predicated region
    $region58: #{tpu_custom_call.1} parent=1 // pred_check
      _
    $region59: #{tpu_custom_call.1} parent=1 // pred_check_branch
      %119 = sbr.rel (0) target = $region61
    $region60: #{tpu_custom_call.1} parent=1 // pred_region
      %120 = dma.done [#allocation9], 8192
    $region61: #{tpu_custom_call.1} parent=1 // pred_fallthru
      _
    // Predicated region
    $region62: #{tpu_custom_call.1} parent=1 // pred_check
      _
    $region63: #{tpu_custom_call.1} parent=1 // pred_check_branch
      %122 = sbr.rel (0) target = $region65
    $region64: #{tpu_custom_call.1} parent=1 // pred_region
      %123 = dma.done [#allocation9], 2048
    $region65: #{tpu_custom_call.1} parent=1 // pred_fallthru
      _
    // Predicated region
    $region66: #{tpu_custom_call.1} parent=1 // pred_check
      _
    $region67: #{tpu_custom_call.1} parent=1 // pred_check_branch
      %125 = sbr.rel (0) target = $region69
    $region68: #{tpu_custom_call.1} parent=1 // pred_region
      %126 = dma.done [#allocation12], 1024
    $region69: #{tpu_custom_call.1} parent=1 // pred_fallthru
      _
    // Predicated region
    $region70: #{tpu_custom_call.1} parent=1 // pred_check
      _
    $region71: #{tpu_custom_call.1} parent=1 // pred_check_branch
      %128 = sbr.rel (0) target = $region73
    $region72: #{tpu_custom_call.1} parent=1 // pred_region
      %129 = dma.done [#allocation12], 1024
    $region73: #{tpu_custom_call.1} parent=1 // pred_fallthru
      _
    %v131 = vld [vmem:[#allocation2] sm:$0xff]
    %v132 = vld [vmem:[#allocation2 + $0x8] sm:$0xff]
    %v133 = vld [vmem:[#allocation2 + $0x10] sm:$0xff]
    %v134 = vld [vmem:[#allocation2 + $0x18] sm:$0xf]
    %v135 = vld [vmem:[#allocation5] sm:$0xff]
    %v136 = vld [vmem:[#allocation5 + $0x8] sm:$0xff]
    %v137 = vld [vmem:[#allocation5 + $0x10] sm:$0xff]
    %v138 = vld [vmem:[#allocation5 + $0x18] sm:$0xff]
    %v139 = vld [vmem:[#allocation5 + $0x20] sm:$0xff]
    %v140 = vld [vmem:[#allocation5 + $0x28] sm:$0xff]
    %v141 = vld [vmem:[#allocation5 + $0x30] sm:$0xff]
    %v142 = vld [vmem:[#allocation5 + $0x38] sm:$0xff]
    %v143 = vld [vmem:[#allocation5 + $0x40] sm:$0xff]
    %v144 = vld [vmem:[#allocation5 + $0x48] sm:$0xff]
    %v145 = vld [vmem:[#allocation5 + $0x50] sm:$0xff]
    %v146 = vld [vmem:[#allocation5 + $0x58] sm:$0xff]
    %v147 = vld [vmem:[#allocation5 + $0x60] sm:$0xff]
    %v148 = vld [vmem:[#allocation5 + $0x68] sm:$0xff]
    %v149 = vld [vmem:[#allocation5 + $0x70] sm:$0xff]
    %v150 = vld [vmem:[#allocation5 + $0x78] sm:$0xff]
    %v151 = vld [vmem:[#allocation5 + $0x80] sm:$0xff]
    %v152 = vld [vmem:[#allocation5 + $0x88] sm:$0xff]
    %v153 = vld [vmem:[#allocation5 + $0x90] sm:$0xff]
    %v154 = vld [vmem:[#allocation5 + $0x98] sm:$0xff]
    %v155 = vld [vmem:[#allocation5 + $0xa0] sm:$0xff]
    %v156 = vld [vmem:[#allocation5 + $0xa8] sm:$0xff]
    %v157 = vld [vmem:[#allocation5 + $0xb0] sm:$0xff]
    %v158 = vld [vmem:[#allocation5 + $0xb8] sm:$0xff]
    %v159 = vld [vmem:[#allocation5 + $0xc0] sm:$0xff]
    %v160 = vld [vmem:[#allocation5 + $0xc8] sm:$0xff]
    %v161 = vld [vmem:[#allocation5 + $0xd0] sm:$0xff]
    %v162 = vld [vmem:[#allocation5 + $0xd8] sm:$0xff]
    %v163 = vld [vmem:[#allocation5 + $0xe0] sm:$0xff]
    %v164 = vld [vmem:[#allocation5 + $0xe8] sm:$0xff]
    %v165 = vld [vmem:[#allocation5 + $0xf0] sm:$0xff]
    %v166 = vld [vmem:[#allocation5 + $0xf8] sm:$0xff]
    %v167 = vld [vmem:[#allocation5 + $0x100] sm:$0xff]
    %v168 = vld [vmem:[#allocation5 + $0x108] sm:$0xff]
    %v169 = vld [vmem:[#allocation5 + $0x110] sm:$0xff]
    %v170 = vld [vmem:[#allocation5 + $0x118] sm:$0xff]
    %v171 = vld [vmem:[#allocation5 + $0x120] sm:$0xff]
    %v172 = vld [vmem:[#allocation5 + $0x128] sm:$0xff]
    %v173 = vld [vmem:[#allocation5 + $0x130] sm:$0xff]
    %v174 = vld [vmem:[#allocation5 + $0x138] sm:$0xff]
    %v175 = vld [vmem:[#allocation5 + $0x140] sm:$0xff]
    %v176 = vld [vmem:[#allocation5 + $0x148] sm:$0xff]
    %v177 = vld [vmem:[#allocation5 + $0x150] sm:$0xff]
    %v178 = vld [vmem:[#allocation5 + $0x158] sm:$0xff]
    %v179 = vld [vmem:[#allocation5 + $0x160] sm:$0xff]
    %v180 = vld [vmem:[#allocation5 + $0x168] sm:$0xff]
    %v181 = vld [vmem:[#allocation5 + $0x170] sm:$0xff]
    %v182 = vld [vmem:[#allocation5 + $0x178] sm:$0xff]
    %v183 = vld [vmem:[#allocation5 + $0x180] sm:$0xff]
    %v184 = vld [vmem:[#allocation5 + $0x188] sm:$0xff]
    %v185 = vld [vmem:[#allocation5 + $0x190] sm:$0xff]
    %v186 = vld [vmem:[#allocation5 + $0x198] sm:$0xff]
    %v187 = vld [vmem:[#allocation5 + $0x1a0] sm:$0xff]
    %v188 = vld [vmem:[#allocation5 + $0x1a8] sm:$0xff]
    %v189 = vld [vmem:[#allocation5 + $0x1b0] sm:$0xff]
    %v190 = vld [vmem:[#allocation5 + $0x1b8] sm:$0xff]
    %v191 = vld [vmem:[#allocation5 + $0x1c0] sm:$0xff]
    %v192 = vld [vmem:[#allocation5 + $0x1c8] sm:$0xff]
    %v193 = vld [vmem:[#allocation5 + $0x1d0] sm:$0xff]
    %v194 = vld [vmem:[#allocation5 + $0x1d8] sm:$0xff]
    %v195 = vld [vmem:[#allocation5 + $0x1e0] sm:$0xff]
    %v196 = vld [vmem:[#allocation5 + $0x1e8] sm:$0xff]
    %v197 = vld [vmem:[#allocation5 + $0x1f0] sm:$0xff]
    %v198 = vld [vmem:[#allocation5 + $0x1f8] sm:$0xff]
    %v199 = vld [vmem:[#allocation5 + $0x200] sm:$0xff]
    %v200 = vld [vmem:[#allocation5 + $0x208] sm:$0xff]
    %v201 = vld [vmem:[#allocation5 + $0x210] sm:$0xff]
    %v202 = vld [vmem:[#allocation5 + $0x218] sm:$0xff]
    %v203 = vld [vmem:[#allocation5 + $0x220] sm:$0xff]
    %v204 = vld [vmem:[#allocation5 + $0x228] sm:$0xff]
    %v205 = vld [vmem:[#allocation5 + $0x230] sm:$0xff]
    %v206 = vld [vmem:[#allocation5 + $0x238] sm:$0xff]
    %v207 = vld [vmem:[#allocation5 + $0x240] sm:$0xff]
    %v208 = vld [vmem:[#allocation5 + $0x248] sm:$0xff]
    %v209 = vld [vmem:[#allocation5 + $0x250] sm:$0xff]
    %v210 = vld [vmem:[#allocation5 + $0x258] sm:$0xff]
    %v211 = vld [vmem:[#allocation5 + $0x260] sm:$0xff]
    %v212 = vld [vmem:[#allocation5 + $0x268] sm:$0xff]
    %v213 = vld [vmem:[#allocation5 + $0x270] sm:$0xff]
    %v214 = vld [vmem:[#allocation5 + $0x278] sm:$0xff]
    %v215 = vld [vmem:[#allocation5 + $0x280] sm:$0xff]
    %v216 = vld [vmem:[#allocation5 + $0x288] sm:$0xff]
    %v217 = vld [vmem:[#allocation5 + $0x290] sm:$0xff]
    %v218 = vld [vmem:[#allocation5 + $0x298] sm:$0xff]
    %v219 = vld [vmem:[#allocation5 + $0x2a0] sm:$0xff]
    %v220 = vld [vmem:[#allocation5 + $0x2a8] sm:$0xff]
    %v221 = vld [vmem:[#allocation5 + $0x2b0] sm:$0xff]
    %v222 = vld [vmem:[#allocation5 + $0x2b8] sm:$0xff]
    %v223 = vld [vmem:[#allocation5 + $0x2c0] sm:$0xff]
    %v224 = vld [vmem:[#allocation5 + $0x2c8] sm:$0xff]
    %v225 = vld [vmem:[#allocation5 + $0x2d0] sm:$0xff]
    %v226 = vld [vmem:[#allocation5 + $0x2d8] sm:$0xff]
    %v227 = vld [vmem:[#allocation5 + $0x2e0] sm:$0xff]
    %v228 = vld [vmem:[#allocation5 + $0x2e8] sm:$0xff]
    %v229 = vld [vmem:[#allocation5 + $0x2f0] sm:$0xff]
    %v230 = vld [vmem:[#allocation5 + $0x2f8] sm:$0xff]
    %v231 = vld [vmem:[#allocation5 + $0x300] sm:$0xff]
    %v232 = vld [vmem:[#allocation5 + $0x308] sm:$0xff]
    %v233 = vld [vmem:[#allocation5 + $0x310] sm:$0xff]
    %v234 = vld [vmem:[#allocation5 + $0x318] sm:$0xff]
    %v235 = vld [vmem:[#allocation5 + $0x320] sm:$0xff]
    %v236 = vld [vmem:[#allocation5 + $0x328] sm:$0xff]
    %v237 = vld [vmem:[#allocation5 + $0x330] sm:$0xff]
    %v238 = vld [vmem:[#allocation5 + $0x338] sm:$0xff]
    %v239 = vld [vmem:[#allocation5 + $0x340] sm:$0xff]
    %v240 = vld [vmem:[#allocation5 + $0x348] sm:$0xff]
    %v241 = vld [vmem:[#allocation5 + $0x350] sm:$0xff]
    %v242 = vld [vmem:[#allocation5 + $0x358] sm:$0xff]
    %v243 = vld [vmem:[#allocation5 + $0x360] sm:$0xff]
    %v244 = vld [vmem:[#allocation5 + $0x368] sm:$0xff]
    %v245 = vld [vmem:[#allocation5 + $0x370] sm:$0xff]
    %v246 = vld [vmem:[#allocation5 + $0x378] sm:$0xff]
    %v247 = vld [vmem:[#allocation5 + $0x380] sm:$0xff]
    %v248 = vld [vmem:[#allocation5 + $0x388] sm:$0xff]
    %v249 = vld [vmem:[#allocation5 + $0x390] sm:$0xff]
    %v250 = vld [vmem:[#allocation5 + $0x398] sm:$0xff]
    %v251 = vld [vmem:[#allocation5 + $0x3a0] sm:$0xff]
    %v252 = vld [vmem:[#allocation5 + $0x3a8] sm:$0xff]
    %v253 = vld [vmem:[#allocation5 + $0x3b0] sm:$0xff]
    %v254 = vld [vmem:[#allocation5 + $0x3b8] sm:$0xff]
    %v255 = vld [vmem:[#allocation5 + $0x3c0] sm:$0xff]
    %v256 = vld [vmem:[#allocation5 + $0x3c8] sm:$0xff]
    %v257 = vld [vmem:[#allocation5 + $0x3d0] sm:$0xff]
    %v258 = vld [vmem:[#allocation5 + $0x3d8] sm:$0xff]
    %v259 = vld [vmem:[#allocation5 + $0x3e0] sm:$0xff]
    %v260 = vld [vmem:[#allocation5 + $0x3e8] sm:$0xff]
    %v261 = vld [vmem:[#allocation5 + $0x3f0] sm:$0xff]
    %v262 = vld [vmem:[#allocation5 + $0x3f8] sm:$0xff]
    %v263 = vld [vmem:[#allocation5 + $0x400] sm:$0xff]
    %v264 = vld [vmem:[#allocation5 + $0x408] sm:$0xff]
    %v265 = vld [vmem:[#allocation5 + $0x410] sm:$0xff]
    %v266 = vld [vmem:[#allocation5 + $0x418] sm:$0xff]
    %v267 = vld [vmem:[#allocation5 + $0x420] sm:$0xff]
    %v268 = vld [vmem:[#allocation5 + $0x428] sm:$0xff]
    %v269 = vld [vmem:[#allocation5 + $0x430] sm:$0xff]
    %v270 = vld [vmem:[#allocation5 + $0x438] sm:$0xff]
    %v271 = vld [vmem:[#allocation5 + $0x440] sm:$0xff]
    %v272 = vld [vmem:[#allocation5 + $0x448] sm:$0xff]
    %v273 = vld [vmem:[#allocation5 + $0x450] sm:$0xff]
    %v274 = vld [vmem:[#allocation5 + $0x458] sm:$0xff]
    %v275 = vld [vmem:[#allocation5 + $0x460] sm:$0xff]
    %v276 = vld [vmem:[#allocation5 + $0x468] sm:$0xff]
    %v277 = vld [vmem:[#allocation5 + $0x470] sm:$0xff]
    %v278 = vld [vmem:[#allocation5 + $0x478] sm:$0xff]
    %v279 = vld [vmem:[#allocation5 + $0x480] sm:$0xff]
    %v280 = vld [vmem:[#allocation5 + $0x488] sm:$0xff]
    %v281 = vld [vmem:[#allocation5 + $0x490] sm:$0xff]
    %v282 = vld [vmem:[#allocation5 + $0x498] sm:$0xff]
    %v283 = vld [vmem:[#allocation5 + $0x4a0] sm:$0xff]
    %v284 = vld [vmem:[#allocation5 + $0x4a8] sm:$0xff]
    %v285 = vld [vmem:[#allocation5 + $0x4b0] sm:$0xff]
    %v286 = vld [vmem:[#allocation5 + $0x4b8] sm:$0xff]
    %v287 = vld [vmem:[#allocation5 + $0x4c0] sm:$0xff]
    %v288 = vld [vmem:[#allocation5 + $0x4c8] sm:$0xff]
    %v289 = vld [vmem:[#allocation5 + $0x4d0] sm:$0xff]
    %v290 = vld [vmem:[#allocation5 + $0x4d8] sm:$0xff]
    %v291 = vld [vmem:[#allocation5 + $0x4e0] sm:$0xff]
    %v292 = vld [vmem:[#allocation5 + $0x4e8] sm:$0xff]
    %v293 = vld [vmem:[#allocation5 + $0x4f0] sm:$0xff]
    %v294 = vld [vmem:[#allocation5 + $0x4f8] sm:$0xff]
    %v295 = vld [vmem:[#allocation5 + $0x500] sm:$0xff]
    %v296 = vld [vmem:[#allocation5 + $0x508] sm:$0xff]
    %v297 = vld [vmem:[#allocation5 + $0x510] sm:$0xff]
    %v298 = vld [vmem:[#allocation5 + $0x518] sm:$0xff]
    %v299 = vld [vmem:[#allocation5 + $0x520] sm:$0xff]
    %v300 = vld [vmem:[#allocation5 + $0x528] sm:$0xff]
    %v301 = vld [vmem:[#allocation5 + $0x530] sm:$0xff]
    %v302 = vld [vmem:[#allocation5 + $0x538] sm:$0xff]
    %v303 = vld [vmem:[#allocation5 + $0x540] sm:$0xff]
    %v304 = vld [vmem:[#allocation5 + $0x548] sm:$0xff]
    %v305 = vld [vmem:[#allocation5 + $0x550] sm:$0xff]
    %v306 = vld [vmem:[#allocation5 + $0x558] sm:$0xff]
    %v307 = vld [vmem:[#allocation5 + $0x560] sm:$0xff]
    %v308 = vld [vmem:[#allocation5 + $0x568] sm:$0xff]
    %v309 = vld [vmem:[#allocation5 + $0x570] sm:$0xff]
    %v310 = vld [vmem:[#allocation5 + $0x578] sm:$0xff]
    %v311 = vld [vmem:[#allocation5 + $0x580] sm:$0xff]
    %v312 = vld [vmem:[#allocation5 + $0x588] sm:$0xff]
    %v313 = vld [vmem:[#allocation5 + $0x590] sm:$0xff]
    %v314 = vld [vmem:[#allocation5 + $0x598] sm:$0xff]
    %v315 = vld [vmem:[#allocation5 + $0x5a0] sm:$0xff]
    %v316 = vld [vmem:[#allocation5 + $0x5a8] sm:$0xff]
    %v317 = vld [vmem:[#allocation5 + $0x5b0] sm:$0xff]
    %v318 = vld [vmem:[#allocation5 + $0x5b8] sm:$0xff]
    %v319 = vld [vmem:[#allocation5 + $0x5c0] sm:$0xff]
    %v320 = vld [vmem:[#allocation5 + $0x5c8] sm:$0xff]
    %v321 = vld [vmem:[#allocation5 + $0x5d0] sm:$0xff]
    %v322 = vld [vmem:[#allocation5 + $0x5d8] sm:$0xff]
    %v323 = vld [vmem:[#allocation5 + $0x5e0] sm:$0xff]
    %v324 = vld [vmem:[#allocation5 + $0x5e8] sm:$0xff]
    %v325 = vld [vmem:[#allocation5 + $0x5f0] sm:$0xff]
    %v326 = vld [vmem:[#allocation5 + $0x5f8] sm:$0xff]
    %v327 = vld [vmem:[#allocation5 + $0x600] sm:$0xff]
    %v328 = vld [vmem:[#allocation5 + $0x608] sm:$0xff]
    %v329 = vld [vmem:[#allocation5 + $0x610] sm:$0xff]
    %v330 = vld [vmem:[#allocation5 + $0x618] sm:$0xff]
    %v331 = vld [vmem:[#allocation5 + $0x620] sm:$0xff]
    %v332 = vld [vmem:[#allocation5 + $0x628] sm:$0xff]
    %v333 = vld [vmem:[#allocation5 + $0x630] sm:$0xff]
    %v334 = vld [vmem:[#allocation5 + $0x638] sm:$0xff]
    %v335 = vld [vmem:[#allocation5 + $0x640] sm:$0xff]
    %v336 = vld [vmem:[#allocation5 + $0x648] sm:$0xff]
    %v337 = vld [vmem:[#allocation5 + $0x650] sm:$0xff]
    %v338 = vld [vmem:[#allocation5 + $0x658] sm:$0xff]
    %v339 = vld [vmem:[#allocation5 + $0x660] sm:$0xff]
    %v340 = vld [vmem:[#allocation5 + $0x668] sm:$0xff]
    %v341 = vld [vmem:[#allocation5 + $0x670] sm:$0xff]
    %v342 = vld [vmem:[#allocation5 + $0x678] sm:$0xff]
    %v343 = vld [vmem:[#allocation5 + $0x680] sm:$0xff]
    %v344 = vld [vmem:[#allocation5 + $0x688] sm:$0xff]
    %v345 = vld [vmem:[#allocation5 + $0x690] sm:$0xff]
    %v346 = vld [vmem:[#allocation5 + $0x698] sm:$0xff]
    %v347 = vld [vmem:[#allocation5 + $0x6a0] sm:$0xff]
    %v348 = vld [vmem:[#allocation5 + $0x6a8] sm:$0xff]
    %v349 = vld [vmem:[#allocation5 + $0x6b0] sm:$0xff]
    %v350 = vld [vmem:[#allocation5 + $0x6b8] sm:$0xff]
    %v351 = vld [vmem:[#allocation5 + $0x6c0] sm:$0xff]
    %v352 = vld [vmem:[#allocation5 + $0x6c8] sm:$0xff]
    %v353 = vld [vmem:[#allocation5 + $0x6d0] sm:$0xff]
    %v354 = vld [vmem:[#allocation5 + $0x6d8] sm:$0xff]
    %v355 = vld [vmem:[#allocation5 + $0x6e0] sm:$0xff]
    %v356 = vld [vmem:[#allocation5 + $0x6e8] sm:$0xff]
    %v357 = vld [vmem:[#allocation5 + $0x6f0] sm:$0xff]
    %v358 = vld [vmem:[#allocation5 + $0x6f8] sm:$0xff]
    %v359 = vld [vmem:[#allocation7] sm:$0xf]
    %v361 = vlaneseq
    %v362 = vshrl.u32 %v361, 7
    %v363 = vsub.s32 0, %v362
    %v364 = vrot.slane %v359, %v363
    %v365 = vlaneseq
    %v366 = vshrl.u32 %v365, 7
    %v367 = vsub.s32 1, %v366
    %v368 = vrot.slane %v359, %v367
    %v369 = vlaneseq
    %v370 = vshrl.u32 %v369, 7
    %v371 = vsub.s32 2, %v370
    %v372 = vrot.slane %v359, %v371
    %v373 = vlaneseq
    %v374 = vshrl.u32 %v373, 7
    %v375 = vsub.s32 3, %v374
    %v376 = vrot.slane %v359, %v375
    %v385 = vunpack.c.l.b16 %v131
    %v386 = vunpack.c.h.b16 %v131
    %v387 = vunpack.c.l.b16 %v132
    %v388 = vunpack.c.h.b16 %v132
    %v389 = vunpack.c.l.b16 %v133
    %v390 = vunpack.c.h.b16 %v133
    %v391 = vunpack.c.l.b16 %v134
    %v392 = vpack.c.b16 %v385, %v385
    %v393 = vpack.c.b16 %v386, %v386
    %v394 = vpack.c.b16 %v387, %v387
    %v395 = vpack.c.b16 %v388, %v388
    %v396 = vpack.c.b16 %v389, %v389
    %v397 = vpack.c.b16 %v390, %v390
    %v398 = vpack.c.b16 %v391, %v391
    %v630 = vunpack.c.l.b16 %v135
    %v631 = vunpack.c.h.b16 %v135
    %v632 = vunpack.c.l.b16 %v136
    %v633 = vunpack.c.h.b16 %v136
    %v634 = vunpack.c.l.b16 %v137
    %v635 = vunpack.c.h.b16 %v137
    %v636 = vunpack.c.l.b16 %v138
    %v637 = vunpack.c.h.b16 %v138
    %v638 = vunpack.c.l.b16 %v139
    %v639 = vunpack.c.h.b16 %v139
    %v640 = vunpack.c.l.b16 %v140
    %v641 = vunpack.c.h.b16 %v140
    %v642 = vunpack.c.l.b16 %v141
    %v643 = vunpack.c.h.b16 %v141
    %v644 = vunpack.c.l.b16 %v142
    %v645 = vunpack.c.h.b16 %v142
    %v646 = vunpack.c.l.b16 %v143
    %v647 = vunpack.c.h.b16 %v143
    %v648 = vunpack.c.l.b16 %v144
    %v649 = vunpack.c.h.b16 %v144
    %v650 = vunpack.c.l.b16 %v145
    %v651 = vunpack.c.h.b16 %v145
    %v652 = vunpack.c.l.b16 %v146
    %v653 = vunpack.c.h.b16 %v146
    %v654 = vunpack.c.l.b16 %v147
    %v655 = vunpack.c.h.b16 %v147
    %v656 = vunpack.c.l.b16 %v148
    %v657 = vunpack.c.h.b16 %v148
    %v658 = vunpack.c.l.b16 %v149
    %v659 = vunpack.c.h.b16 %v149
    %v660 = vunpack.c.l.b16 %v150
    %v661 = vunpack.c.h.b16 %v150
    %v662 = vunpack.c.l.b16 %v151
    %v663 = vunpack.c.h.b16 %v151
    %v664 = vunpack.c.l.b16 %v152
    %v665 = vunpack.c.h.b16 %v152
    %v666 = vunpack.c.l.b16 %v153
    %v667 = vunpack.c.h.b16 %v153
    %v668 = vunpack.c.l.b16 %v154
    %v669 = vunpack.c.h.b16 %v154
    %v670 = vunpack.c.l.b16 %v155
    %v671 = vunpack.c.h.b16 %v155
    %v672 = vunpack.c.l.b16 %v156
    %v673 = vunpack.c.h.b16 %v156
    %v674 = vunpack.c.l.b16 %v157
    %v675 = vunpack.c.h.b16 %v157
    %v676 = vunpack.c.l.b16 %v158
    %v677 = vunpack.c.h.b16 %v158
    %v678 = vunpack.c.l.b16 %v159
    %v679 = vunpack.c.h.b16 %v159
    %v680 = vunpack.c.l.b16 %v160
    %v681 = vunpack.c.h.b16 %v160
    %v682 = vunpack.c.l.b16 %v161
    %v683 = vunpack.c.h.b16 %v161
    %v684 = vunpack.c.l.b16 %v162
    %v685 = vunpack.c.h.b16 %v162
    %v686 = vunpack.c.l.b16 %v163
    %v687 = vunpack.c.h.b16 %v163
    %v688 = vunpack.c.l.b16 %v164
    %v689 = vunpack.c.h.b16 %v164
    %v690 = vunpack.c.l.b16 %v165
    %v691 = vunpack.c.h.b16 %v165
    %v692 = vunpack.c.l.b16 %v166
    %v693 = vunpack.c.h.b16 %v166
    %v694 = vunpack.c.l.b16 %v167
    %v695 = vunpack.c.h.b16 %v167
    %v696 = vunpack.c.l.b16 %v168
    %v697 = vunpack.c.h.b16 %v168
    %v698 = vunpack.c.l.b16 %v169
    %v699 = vunpack.c.h.b16 %v169
    %v700 = vunpack.c.l.b16 %v170
    %v701 = vunpack.c.h.b16 %v170
    %v702 = vunpack.c.l.b16 %v171
    %v703 = vunpack.c.h.b16 %v171
    %v704 = vunpack.c.l.b16 %v172
    %v705 = vunpack.c.h.b16 %v172
    %v706 = vunpack.c.l.b16 %v173
    %v707 = vunpack.c.h.b16 %v173
    %v708 = vunpack.c.l.b16 %v174
    %v709 = vunpack.c.h.b16 %v174
    %v710 = vunpack.c.l.b16 %v175
    %v711 = vunpack.c.h.b16 %v175
    %v712 = vunpack.c.l.b16 %v176
    %v713 = vunpack.c.h.b16 %v176
    %v714 = vunpack.c.l.b16 %v177
    %v715 = vunpack.c.h.b16 %v177
    %v716 = vunpack.c.l.b16 %v178
    %v717 = vunpack.c.h.b16 %v178
    %v718 = vunpack.c.l.b16 %v179
    %v719 = vunpack.c.h.b16 %v179
    %v720 = vunpack.c.l.b16 %v180
    %v721 = vunpack.c.h.b16 %v180
    %v722 = vunpack.c.l.b16 %v181
    %v723 = vunpack.c.h.b16 %v181
    %v724 = vunpack.c.l.b16 %v182
    %v725 = vunpack.c.h.b16 %v182
    %v726 = vunpack.c.l.b16 %v183
    %v727 = vunpack.c.h.b16 %v183
    %v728 = vunpack.c.l.b16 %v184
    %v729 = vunpack.c.h.b16 %v184
    %v730 = vunpack.c.l.b16 %v185
    %v731 = vunpack.c.h.b16 %v185
    %v732 = vunpack.c.l.b16 %v186
    %v733 = vunpack.c.h.b16 %v186
    %v734 = vunpack.c.l.b16 %v187
    %v735 = vunpack.c.h.b16 %v187
    %v736 = vunpack.c.l.b16 %v188
    %v737 = vunpack.c.h.b16 %v188
    %v738 = vunpack.c.l.b16 %v189
    %v739 = vunpack.c.h.b16 %v189
    %v740 = vunpack.c.l.b16 %v190
    %v741 = vunpack.c.h.b16 %v190
    %v742 = vunpack.c.l.b16 %v191
    %v743 = vunpack.c.h.b16 %v191
    %v744 = vunpack.c.l.b16 %v192
    %v745 = vunpack.c.h.b16 %v192
    %v746 = vunpack.c.l.b16 %v193
    %v747 = vunpack.c.h.b16 %v193
    %v748 = vunpack.c.l.b16 %v194
    %v749 = vunpack.c.h.b16 %v194
    %v750 = vunpack.c.l.b16 %v195
    %v751 = vunpack.c.h.b16 %v195
    %v752 = vunpack.c.l.b16 %v196
    %v753 = vunpack.c.h.b16 %v196
    %v754 = vunpack.c.l.b16 %v197
    %v755 = vunpack.c.h.b16 %v197
    %v756 = vunpack.c.l.b16 %v198
    %v757 = vunpack.c.h.b16 %v198
    %v758 = vunpack.c.l.b16 %v199
    %v759 = vunpack.c.h.b16 %v199
    %v760 = vunpack.c.l.b16 %v200
    %v761 = vunpack.c.h.b16 %v200
    %v762 = vunpack.c.l.b16 %v201
    %v763 = vunpack.c.h.b16 %v201
    %v764 = vunpack.c.l.b16 %v202
    %v765 = vunpack.c.h.b16 %v202
    %v766 = vunpack.c.l.b16 %v203
    %v767 = vunpack.c.h.b16 %v203
    %v768 = vunpack.c.l.b16 %v204
    %v769 = vunpack.c.h.b16 %v204
    %v770 = vunpack.c.l.b16 %v205
    %v771 = vunpack.c.h.b16 %v205
    %v772 = vunpack.c.l.b16 %v206
    %v773 = vunpack.c.h.b16 %v206
    %v774 = vunpack.c.l.b16 %v207
    %v775 = vunpack.c.h.b16 %v207
    %v776 = vunpack.c.l.b16 %v208
    %v777 = vunpack.c.h.b16 %v208
    %v778 = vunpack.c.l.b16 %v209
    %v779 = vunpack.c.h.b16 %v209
    %v780 = vunpack.c.l.b16 %v210
    %v781 = vunpack.c.h.b16 %v210
    %v782 = vunpack.c.l.b16 %v211
    %v783 = vunpack.c.h.b16 %v211
    %v784 = vunpack.c.l.b16 %v212
    %v785 = vunpack.c.h.b16 %v212
    %v786 = vunpack.c.l.b16 %v213
    %v787 = vunpack.c.h.b16 %v213
    %v788 = vunpack.c.l.b16 %v214
    %v789 = vunpack.c.h.b16 %v214
    %v790 = vunpack.c.l.b16 %v215
    %v791 = vunpack.c.h.b16 %v215
    %v792 = vunpack.c.l.b16 %v216
    %v793 = vunpack.c.h.b16 %v216
    %v794 = vunpack.c.l.b16 %v217
    %v795 = vunpack.c.h.b16 %v217
    %v796 = vunpack.c.l.b16 %v218
    %v797 = vunpack.c.h.b16 %v218
    %v798 = vunpack.c.l.b16 %v219
    %v799 = vunpack.c.h.b16 %v219
    %v800 = vunpack.c.l.b16 %v220
    %v801 = vunpack.c.h.b16 %v220
    %v802 = vunpack.c.l.b16 %v221
    %v803 = vunpack.c.h.b16 %v221
    %v804 = vunpack.c.l.b16 %v222
    %v805 = vunpack.c.h.b16 %v222
    %v806 = vunpack.c.l.b16 %v223
    %v807 = vunpack.c.h.b16 %v223
    %v808 = vunpack.c.l.b16 %v224
    %v809 = vunpack.c.h.b16 %v224
    %v810 = vunpack.c.l.b16 %v225
    %v811 = vunpack.c.h.b16 %v225
    %v812 = vunpack.c.l.b16 %v226
    %v813 = vunpack.c.h.b16 %v226
    %v814 = vunpack.c.l.b16 %v227
    %v815 = vunpack.c.h.b16 %v227
    %v816 = vunpack.c.l.b16 %v228
    %v817 = vunpack.c.h.b16 %v228
    %v818 = vunpack.c.l.b16 %v229
    %v819 = vunpack.c.h.b16 %v229
    %v820 = vunpack.c.l.b16 %v230
    %v821 = vunpack.c.h.b16 %v230
    %v822 = vunpack.c.l.b16 %v231
    %v823 = vunpack.c.h.b16 %v231
    %v824 = vunpack.c.l.b16 %v232
    %v825 = vunpack.c.h.b16 %v232
    %v826 = vunpack.c.l.b16 %v233
    %v827 = vunpack.c.h.b16 %v233
    %v828 = vunpack.c.l.b16 %v234
    %v829 = vunpack.c.h.b16 %v234
    %v830 = vunpack.c.l.b16 %v235
    %v831 = vunpack.c.h.b16 %v235
    %v832 = vunpack.c.l.b16 %v236
    %v833 = vunpack.c.h.b16 %v236
    %v834 = vunpack.c.l.b16 %v237
    %v835 = vunpack.c.h.b16 %v237
    %v836 = vunpack.c.l.b16 %v238
    %v837 = vunpack.c.h.b16 %v238
    %v838 = vunpack.c.l.b16 %v239
    %v839 = vunpack.c.h.b16 %v239
    %v840 = vunpack.c.l.b16 %v240
    %v841 = vunpack.c.h.b16 %v240
    %v842 = vunpack.c.l.b16 %v241
    %v843 = vunpack.c.h.b16 %v241
    %v844 = vunpack.c.l.b16 %v242
    %v845 = vunpack.c.h.b16 %v242
    %v846 = vunpack.c.l.b16 %v243
    %v847 = vunpack.c.h.b16 %v243
    %v848 = vunpack.c.l.b16 %v244
    %v849 = vunpack.c.h.b16 %v244
    %v850 = vunpack.c.l.b16 %v245
    %v851 = vunpack.c.h.b16 %v245
    %v852 = vunpack.c.l.b16 %v246
    %v853 = vunpack.c.h.b16 %v246
    %v854 = vunpack.c.l.b16 %v247
    %v855 = vunpack.c.h.b16 %v247
    %v856 = vunpack.c.l.b16 %v248
    %v857 = vunpack.c.h.b16 %v248
    %v858 = vunpack.c.l.b16 %v249
    %v859 = vunpack.c.h.b16 %v249
    %v860 = vunpack.c.l.b16 %v250
    %v861 = vunpack.c.h.b16 %v250
    %v862 = vunpack.c.l.b16 %v251
    %v863 = vunpack.c.h.b16 %v251
    %v864 = vunpack.c.l.b16 %v252
    %v865 = vunpack.c.h.b16 %v252
    %v866 = vunpack.c.l.b16 %v253
    %v867 = vunpack.c.h.b16 %v253
    %v868 = vunpack.c.l.b16 %v254
    %v869 = vunpack.c.h.b16 %v254
    %v870 = vunpack.c.l.b16 %v255
    %v871 = vunpack.c.h.b16 %v255
    %v872 = vunpack.c.l.b16 %v256
    %v873 = vunpack.c.h.b16 %v256
    %v874 = vunpack.c.l.b16 %v257
    %v875 = vunpack.c.h.b16 %v257
    %v876 = vunpack.c.l.b16 %v258
    %v877 = vunpack.c.h.b16 %v258
    %v878 = vunpack.c.l.b16 %v259
    %v879 = vunpack.c.h.b16 %v259
    %v880 = vunpack.c.l.b16 %v260
    %v881 = vunpack.c.h.b16 %v260
    %v882 = vunpack.c.l.b16 %v261
    %v883 = vunpack.c.h.b16 %v261
    %v884 = vunpack.c.l.b16 %v262
    %v885 = vunpack.c.h.b16 %v262
    %v886 = vunpack.c.l.b16 %v263
    %v887 = vunpack.c.h.b16 %v263
    %v888 = vunpack.c.l.b16 %v264
    %v889 = vunpack.c.h.b16 %v264
    %v890 = vunpack.c.l.b16 %v265
    %v891 = vunpack.c.h.b16 %v265
    %v892 = vunpack.c.l.b16 %v266
    %v893 = vunpack.c.h.b16 %v266
    %v894 = vunpack.c.l.b16 %v267
    %v895 = vunpack.c.h.b16 %v267
    %v896 = vunpack.c.l.b16 %v268
    %v897 = vunpack.c.h.b16 %v268
    %v898 = vunpack.c.l.b16 %v269
    %v899 = vunpack.c.h.b16 %v269
    %v900 = vunpack.c.l.b16 %v270
    %v901 = vunpack.c.h.b16 %v270
    %v902 = vunpack.c.l.b16 %v271
    %v903 = vunpack.c.h.b16 %v271
    %v904 = vunpack.c.l.b16 %v272
    %v905 = vunpack.c.h.b16 %v272
    %v906 = vunpack.c.l.b16 %v273
    %v907 = vunpack.c.h.b16 %v273
    %v908 = vunpack.c.l.b16 %v274
    %v909 = vunpack.c.h.b16 %v274
    %v910 = vunpack.c.l.b16 %v275
    %v911 = vunpack.c.h.b16 %v275
    %v912 = vunpack.c.l.b16 %v276
    %v913 = vunpack.c.h.b16 %v276
    %v914 = vunpack.c.l.b16 %v277
    %v915 = vunpack.c.h.b16 %v277
    %v916 = vunpack.c.l.b16 %v278
    %v917 = vunpack.c.h.b16 %v278
    %v918 = vunpack.c.l.b16 %v279
    %v919 = vunpack.c.h.b16 %v279
    %v920 = vunpack.c.l.b16 %v280
    %v921 = vunpack.c.h.b16 %v280
    %v922 = vunpack.c.l.b16 %v281
    %v923 = vunpack.c.h.b16 %v281
    %v924 = vunpack.c.l.b16 %v282
    %v925 = vunpack.c.h.b16 %v282
    %v926 = vunpack.c.l.b16 %v283
    %v927 = vunpack.c.h.b16 %v283
    %v928 = vunpack.c.l.b16 %v284
    %v929 = vunpack.c.h.b16 %v284
    %v930 = vunpack.c.l.b16 %v285
    %v931 = vunpack.c.h.b16 %v285
    %v932 = vunpack.c.l.b16 %v286
    %v933 = vunpack.c.h.b16 %v286
    %v934 = vunpack.c.l.b16 %v287
    %v935 = vunpack.c.h.b16 %v287
    %v936 = vunpack.c.l.b16 %v288
    %v937 = vunpack.c.h.b16 %v288
    %v938 = vunpack.c.l.b16 %v289
    %v939 = vunpack.c.h.b16 %v289
    %v940 = vunpack.c.l.b16 %v290
    %v941 = vunpack.c.h.b16 %v290
    %v942 = vunpack.c.l.b16 %v291
    %v943 = vunpack.c.h.b16 %v291
    %v944 = vunpack.c.l.b16 %v292
    %v945 = vunpack.c.h.b16 %v292
    %v946 = vunpack.c.l.b16 %v293
    %v947 = vunpack.c.h.b16 %v293
    %v948 = vunpack.c.l.b16 %v294
    %v949 = vunpack.c.h.b16 %v294
    %v950 = vunpack.c.l.b16 %v295
    %v951 = vunpack.c.h.b16 %v295
    %v952 = vunpack.c.l.b16 %v296
    %v953 = vunpack.c.h.b16 %v296
    %v954 = vunpack.c.l.b16 %v297
    %v955 = vunpack.c.h.b16 %v297
    %v956 = vunpack.c.l.b16 %v298
    %v957 = vunpack.c.h.b16 %v298
    %v958 = vunpack.c.l.b16 %v299
    %v959 = vunpack.c.h.b16 %v299
    %v960 = vunpack.c.l.b16 %v300
    %v961 = vunpack.c.h.b16 %v300
    %v962 = vunpack.c.l.b16 %v301
    %v963 = vunpack.c.h.b16 %v301
    %v964 = vunpack.c.l.b16 %v302
    %v965 = vunpack.c.h.b16 %v302
    %v966 = vunpack.c.l.b16 %v303
    %v967 = vunpack.c.h.b16 %v303
    %v968 = vunpack.c.l.b16 %v304
    %v969 = vunpack.c.h.b16 %v304
    %v970 = vunpack.c.l.b16 %v305
    %v971 = vunpack.c.h.b16 %v305
    %v972 = vunpack.c.l.b16 %v306
    %v973 = vunpack.c.h.b16 %v306
    %v974 = vunpack.c.l.b16 %v307
    %v975 = vunpack.c.h.b16 %v307
    %v976 = vunpack.c.l.b16 %v308
    %v977 = vunpack.c.h.b16 %v308
    %v978 = vunpack.c.l.b16 %v309
    %v979 = vunpack.c.h.b16 %v309
    %v980 = vunpack.c.l.b16 %v310
    %v981 = vunpack.c.h.b16 %v310
    %v982 = vunpack.c.l.b16 %v311
    %v983 = vunpack.c.h.b16 %v311
    %v984 = vunpack.c.l.b16 %v312
    %v985 = vunpack.c.h.b16 %v312
    %v986 = vunpack.c.l.b16 %v313
    %v987 = vunpack.c.h.b16 %v313
    %v988 = vunpack.c.l.b16 %v314
    %v989 = vunpack.c.h.b16 %v314
    %v990 = vunpack.c.l.b16 %v315
    %v991 = vunpack.c.h.b16 %v315
    %v992 = vunpack.c.l.b16 %v316
    %v993 = vunpack.c.h.b16 %v316
    %v994 = vunpack.c.l.b16 %v317
    %v995 = vunpack.c.h.b16 %v317
    %v996 = vunpack.c.l.b16 %v318
    %v997 = vunpack.c.h.b16 %v318
    %v998 = vunpack.c.l.b16 %v319
    %v999 = vunpack.c.h.b16 %v319
    %v1000 = vunpack.c.l.b16 %v320
    %v1001 = vunpack.c.h.b16 %v320
    %v1002 = vunpack.c.l.b16 %v321
    %v1003 = vunpack.c.h.b16 %v321
    %v1004 = vunpack.c.l.b16 %v322
    %v1005 = vunpack.c.h.b16 %v322
    %v1006 = vunpack.c.l.b16 %v323
    %v1007 = vunpack.c.h.b16 %v323
    %v1008 = vunpack.c.l.b16 %v324
    %v1009 = vunpack.c.h.b16 %v324
    %v1010 = vunpack.c.l.b16 %v325
    %v1011 = vunpack.c.h.b16 %v325
    %v1012 = vunpack.c.l.b16 %v326
    %v1013 = vunpack.c.h.b16 %v326
    %v1014 = vunpack.c.l.b16 %v327
    %v1015 = vunpack.c.h.b16 %v327
    %v1016 = vunpack.c.l.b16 %v328
    %v1017 = vunpack.c.h.b16 %v328
    %v1018 = vunpack.c.l.b16 %v329
    %v1019 = vunpack.c.h.b16 %v329
    %v1020 = vunpack.c.l.b16 %v330
    %v1021 = vunpack.c.h.b16 %v330
    %v1022 = vunpack.c.l.b16 %v331
    %v1023 = vunpack.c.h.b16 %v331
    %v1024 = vunpack.c.l.b16 %v332
    %v1025 = vunpack.c.h.b16 %v332
    %v1026 = vunpack.c.l.b16 %v333
    %v1027 = vunpack.c.h.b16 %v333
    %v1028 = vunpack.c.l.b16 %v334
    %v1029 = vunpack.c.h.b16 %v334
    %v1030 = vunpack.c.l.b16 %v335
    %v1031 = vunpack.c.h.b16 %v335
    %v1032 = vunpack.c.l.b16 %v336
    %v1033 = vunpack.c.h.b16 %v336
    %v1034 = vunpack.c.l.b16 %v337
    %v1035 = vunpack.c.h.b16 %v337
    %v1036 = vunpack.c.l.b16 %v338
    %v1037 = vunpack.c.h.b16 %v338
    %v1038 = vunpack.c.l.b16 %v339
    %v1039 = vunpack.c.h.b16 %v339
    %v1040 = vunpack.c.l.b16 %v340
    %v1041 = vunpack.c.h.b16 %v340
    %v1042 = vunpack.c.l.b16 %v341
    %v1043 = vunpack.c.h.b16 %v341
    %v1044 = vunpack.c.l.b16 %v342
    %v1045 = vunpack.c.h.b16 %v342
    %v1046 = vunpack.c.l.b16 %v343
    %v1047 = vunpack.c.h.b16 %v343
    %v1048 = vunpack.c.l.b16 %v344
    %v1049 = vunpack.c.h.b16 %v344
    %v1050 = vunpack.c.l.b16 %v345
    %v1051 = vunpack.c.h.b16 %v345
    %v1052 = vunpack.c.l.b16 %v346
    %v1053 = vunpack.c.h.b16 %v346
    %v1054 = vunpack.c.l.b16 %v347
    %v1055 = vunpack.c.h.b16 %v347
    %v1056 = vunpack.c.l.b16 %v348
    %v1057 = vunpack.c.h.b16 %v348
    %v1058 = vunpack.c.l.b16 %v349
    %v1059 = vunpack.c.h.b16 %v349
    %v1060 = vunpack.c.l.b16 %v350
    %v1061 = vunpack.c.h.b16 %v350
    %v1062 = vunpack.c.l.b16 %v351
    %v1063 = vunpack.c.h.b16 %v351
    %v1064 = vunpack.c.l.b16 %v352
    %v1065 = vunpack.c.h.b16 %v352
    %v1066 = vunpack.c.l.b16 %v353
    %v1067 = vunpack.c.h.b16 %v353
    %v1068 = vunpack.c.l.b16 %v354
    %v1069 = vunpack.c.h.b16 %v354
    %v1070 = vunpack.c.l.b16 %v355
    %v1071 = vunpack.c.h.b16 %v355
    %v1072 = vunpack.c.l.b16 %v356
    %v1073 = vunpack.c.h.b16 %v356
    %v1074 = vunpack.c.l.b16 %v357
    %v1075 = vunpack.c.h.b16 %v357
    %v1076 = vunpack.c.l.b16 %v358
    %v1077 = vunpack.c.h.b16 %v358
    %v1078 = vpack.c.b16 %v634, %v630
    %v1079 = vpack.c.b16 %v635, %v631
    %v1080 = vpack.c.b16 %v636, %v632
    %v1081 = vpack.c.b16 %v637, %v633
    %v1082 = vpack.c.b16 %v642, %v638
    %v1083 = vpack.c.b16 %v643, %v639
    %v1084 = vpack.c.b16 %v644, %v640
    %v1085 = vpack.c.b16 %v645, %v641
    %v1086 = vpack.c.b16 %v650, %v646
    %v1087 = vpack.c.b16 %v651, %v647
    %v1088 = vpack.c.b16 %v652, %v648
    %v1089 = vpack.c.b16 %v653, %v649
    %v1090 = vpack.c.b16 %v658, %v654
    %v1091 = vpack.c.b16 %v659, %v655
    %v1092 = vpack.c.b16 %v660, %v656
    %v1093 = vpack.c.b16 %v661, %v657
    %v1094 = vpack.c.b16 %v666, %v662
    %v1095 = vpack.c.b16 %v667, %v663
    %v1096 = vpack.c.b16 %v668, %v664
    %v1097 = vpack.c.b16 %v669, %v665
    %v1098 = vpack.c.b16 %v674, %v670
    %v1099 = vpack.c.b16 %v675, %v671
    %v1100 = vpack.c.b16 %v676, %v672
    %v1101 = vpack.c.b16 %v677, %v673
    %v1102 = vpack.c.b16 %v682, %v678
    %v1103 = vpack.c.b16 %v683, %v679
    %v1104 = vpack.c.b16 %v684, %v680
    %v1105 = vpack.c.b16 %v685, %v681
    %v1106 = vpack.c.b16 %v690, %v686
    %v1107 = vpack.c.b16 %v691, %v687
    %v1108 = vpack.c.b16 %v692, %v688
    %v1109 = vpack.c.b16 %v693, %v689
    %v1110 = vpack.c.b16 %v698, %v694
    %v1111 = vpack.c.b16 %v699, %v695
    %v1112 = vpack.c.b16 %v700, %v696
    %v1113 = vpack.c.b16 %v701, %v697
    %v1114 = vpack.c.b16 %v706, %v702
    %v1115 = vpack.c.b16 %v707, %v703
    %v1116 = vpack.c.b16 %v708, %v704
    %v1117 = vpack.c.b16 %v709, %v705
    %v1118 = vpack.c.b16 %v714, %v710
    %v1119 = vpack.c.b16 %v715, %v711
    %v1120 = vpack.c.b16 %v716, %v712
    %v1121 = vpack.c.b16 %v717, %v713
    %v1122 = vpack.c.b16 %v722, %v718
    %v1123 = vpack.c.b16 %v723, %v719
    %v1124 = vpack.c.b16 %v724, %v720
    %v1125 = vpack.c.b16 %v725, %v721
    %v1126 = vpack.c.b16 %v730, %v726
    %v1127 = vpack.c.b16 %v731, %v727
    %v1128 = vpack.c.b16 %v732, %v728
    %v1129 = vpack.c.b16 %v733, %v729
    %v1130 = vpack.c.b16 %v738, %v734
    %v1131 = vpack.c.b16 %v739, %v735
    %v1132 = vpack.c.b16 %v740, %v736
    %v1133 = vpack.c.b16 %v741, %v737
    %v1134 = vpack.c.b16 %v746, %v742
    %v1135 = vpack.c.b16 %v747, %v743
    %v1136 = vpack.c.b16 %v748, %v744
    %v1137 = vpack.c.b16 %v749, %v745
    %v1138 = vpack.c.b16 %v754, %v750
    %v1139 = vpack.c.b16 %v755, %v751
    %v1140 = vpack.c.b16 %v756, %v752
    %v1141 = vpack.c.b16 %v757, %v753
    %v1142 = vpack.c.b16 %v762, %v758
    %v1143 = vpack.c.b16 %v763, %v759
    %v1144 = vpack.c.b16 %v764, %v760
    %v1145 = vpack.c.b16 %v765, %v761
    %v1146 = vpack.c.b16 %v770, %v766
    %v1147 = vpack.c.b16 %v771, %v767
    %v1148 = vpack.c.b16 %v772, %v768
    %v1149 = vpack.c.b16 %v773, %v769
    %v1150 = vpack.c.b16 %v778, %v774
    %v1151 = vpack.c.b16 %v779, %v775
    %v1152 = vpack.c.b16 %v780, %v776
    %v1153 = vpack.c.b16 %v781, %v777
    %v1154 = vpack.c.b16 %v786, %v782
    %v1155 = vpack.c.b16 %v787, %v783
    %v1156 = vpack.c.b16 %v788, %v784
    %v1157 = vpack.c.b16 %v789, %v785
    %v1158 = vpack.c.b16 %v794, %v790
    %v1159 = vpack.c.b16 %v795, %v791
    %v1160 = vpack.c.b16 %v796, %v792
    %v1161 = vpack.c.b16 %v797, %v793
    %v1162 = vpack.c.b16 %v802, %v798
    %v1163 = vpack.c.b16 %v803, %v799
    %v1164 = vpack.c.b16 %v804, %v800
    %v1165 = vpack.c.b16 %v805, %v801
    %v1166 = vpack.c.b16 %v810, %v806
    %v1167 = vpack.c.b16 %v811, %v807
    %v1168 = vpack.c.b16 %v812, %v808
    %v1169 = vpack.c.b16 %v813, %v809
    %v1170 = vpack.c.b16 %v818, %v814
    %v1171 = vpack.c.b16 %v819, %v815
    %v1172 = vpack.c.b16 %v820, %v816
    %v1173 = vpack.c.b16 %v821, %v817
    %v1174 = vpack.c.b16 %v826, %v822
    %v1175 = vpack.c.b16 %v827, %v823
    %v1176 = vpack.c.b16 %v828, %v824
    %v1177 = vpack.c.b16 %v829, %v825
    %v1178 = vpack.c.b16 %v834, %v830
    %v1179 = vpack.c.b16 %v835, %v831
    %v1180 = vpack.c.b16 %v836, %v832
    %v1181 = vpack.c.b16 %v837, %v833
    %v1182 = vpack.c.b16 %v842, %v838
    %v1183 = vpack.c.b16 %v843, %v839
    %v1184 = vpack.c.b16 %v844, %v840
    %v1185 = vpack.c.b16 %v845, %v841
    %v1186 = vpack.c.b16 %v850, %v846
    %v1187 = vpack.c.b16 %v851, %v847
    %v1188 = vpack.c.b16 %v852, %v848
    %v1189 = vpack.c.b16 %v853, %v849
    %v1190 = vpack.c.b16 %v858, %v854
    %v1191 = vpack.c.b16 %v859, %v855
    %v1192 = vpack.c.b16 %v860, %v856
    %v1193 = vpack.c.b16 %v861, %v857
    %v1194 = vpack.c.b16 %v866, %v862
    %v1195 = vpack.c.b16 %v867, %v863
    %v1196 = vpack.c.b16 %v868, %v864
    %v1197 = vpack.c.b16 %v869, %v865
    %v1198 = vpack.c.b16 %v874, %v870
    %v1199 = vpack.c.b16 %v875, %v871
    %v1200 = vpack.c.b16 %v876, %v872
    %v1201 = vpack.c.b16 %v877, %v873
    %v1202 = vpack.c.b16 %v882, %v878
    %v1203 = vpack.c.b16 %v883, %v879
    %v1204 = vpack.c.b16 %v884, %v880
    %v1205 = vpack.c.b16 %v885, %v881
    %v1206 = vpack.c.b16 %v890, %v886
    %v1207 = vpack.c.b16 %v891, %v887
    %v1208 = vpack.c.b16 %v892, %v888
    %v1209 = vpack.c.b16 %v893, %v889
    %v1210 = vpack.c.b16 %v898, %v894
    %v1211 = vpack.c.b16 %v899, %v895
    %v1212 = vpack.c.b16 %v900, %v896
    %v1213 = vpack.c.b16 %v901, %v897
    %v1214 = vpack.c.b16 %v906, %v902
    %v1215 = vpack.c.b16 %v907, %v903
    %v1216 = vpack.c.b16 %v908, %v904
    %v1217 = vpack.c.b16 %v909, %v905
    %v1218 = vpack.c.b16 %v914, %v910
    %v1219 = vpack.c.b16 %v915, %v911
    %v1220 = vpack.c.b16 %v916, %v912
    %v1221 = vpack.c.b16 %v917, %v913
    %v1222 = vpack.c.b16 %v922, %v918
    %v1223 = vpack.c.b16 %v923, %v919
    %v1224 = vpack.c.b16 %v924, %v920
    %v1225 = vpack.c.b16 %v925, %v921
    %v1226 = vpack.c.b16 %v930, %v926
    %v1227 = vpack.c.b16 %v931, %v927
    %v1228 = vpack.c.b16 %v932, %v928
    %v1229 = vpack.c.b16 %v933, %v929
    %v1230 = vpack.c.b16 %v938, %v934
    %v1231 = vpack.c.b16 %v939, %v935
    %v1232 = vpack.c.b16 %v940, %v936
    %v1233 = vpack.c.b16 %v941, %v937
    %v1234 = vpack.c.b16 %v946, %v942
    %v1235 = vpack.c.b16 %v947, %v943
    %v1236 = vpack.c.b16 %v948, %v944
    %v1237 = vpack.c.b16 %v949, %v945
    %v1238 = vpack.c.b16 %v954, %v950
    %v1239 = vpack.c.b16 %v955, %v951
    %v1240 = vpack.c.b16 %v956, %v952
    %v1241 = vpack.c.b16 %v957, %v953
    %v1242 = vpack.c.b16 %v962, %v958
    %v1243 = vpack.c.b16 %v963, %v959
    %v1244 = vpack.c.b16 %v964, %v960
    %v1245 = vpack.c.b16 %v965, %v961
    %v1246 = vpack.c.b16 %v970, %v966
    %v1247 = vpack.c.b16 %v971, %v967
    %v1248 = vpack.c.b16 %v972, %v968
    %v1249 = vpack.c.b16 %v973, %v969
    %v1250 = vpack.c.b16 %v978, %v974
    %v1251 = vpack.c.b16 %v979, %v975
    %v1252 = vpack.c.b16 %v980, %v976
    %v1253 = vpack.c.b16 %v981, %v977
    %v1254 = vpack.c.b16 %v986, %v982
    %v1255 = vpack.c.b16 %v987, %v983
    %v1256 = vpack.c.b16 %v988, %v984
    %v1257 = vpack.c.b16 %v989, %v985
    %v1258 = vpack.c.b16 %v994, %v990
    %v1259 = vpack.c.b16 %v995, %v991
    %v1260 = vpack.c.b16 %v996, %v992
    %v1261 = vpack.c.b16 %v997, %v993
    %v1262 = vpack.c.b16 %v1002, %v998
    %v1263 = vpack.c.b16 %v1003, %v999
    %v1264 = vpack.c.b16 %v1004, %v1000
    %v1265 = vpack.c.b16 %v1005, %v1001
    %v1266 = vpack.c.b16 %v1010, %v1006
    %v1267 = vpack.c.b16 %v1011, %v1007
    %v1268 = vpack.c.b16 %v1012, %v1008
    %v1269 = vpack.c.b16 %v1013, %v1009
    %v1270 = vpack.c.b16 %v1018, %v1014
    %v1271 = vpack.c.b16 %v1019, %v1015
    %v1272 = vpack.c.b16 %v1020, %v1016
    %v1273 = vpack.c.b16 %v1021, %v1017
    %v1274 = vpack.c.b16 %v1026, %v1022
    %v1275 = vpack.c.b16 %v1027, %v1023
    %v1276 = vpack.c.b16 %v1028, %v1024
    %v1277 = vpack.c.b16 %v1029, %v1025
    %v1278 = vpack.c.b16 %v1034, %v1030
    %v1279 = vpack.c.b16 %v1035, %v1031
    %v1280 = vpack.c.b16 %v1036, %v1032
    %v1281 = vpack.c.b16 %v1037, %v1033
    %v1282 = vpack.c.b16 %v1042, %v1038
    %v1283 = vpack.c.b16 %v1043, %v1039
    %v1284 = vpack.c.b16 %v1044, %v1040
    %v1285 = vpack.c.b16 %v1045, %v1041
    %v1286 = vpack.c.b16 %v1050, %v1046
    %v1287 = vpack.c.b16 %v1051, %v1047
    %v1288 = vpack.c.b16 %v1052, %v1048
    %v1289 = vpack.c.b16 %v1053, %v1049
    %v1290 = vpack.c.b16 %v1058, %v1054
    %v1291 = vpack.c.b16 %v1059, %v1055
    %v1292 = vpack.c.b16 %v1060, %v1056
    %v1293 = vpack.c.b16 %v1061, %v1057
    %v1294 = vpack.c.b16 %v1066, %v1062
    %v1295 = vpack.c.b16 %v1067, %v1063
    %v1296 = vpack.c.b16 %v1068, %v1064
    %v1297 = vpack.c.b16 %v1069, %v1065
    %v1298 = vpack.c.b16 %v1074, %v1070
    %v1299 = vpack.c.b16 %v1075, %v1071
    %v1300 = vpack.c.b16 %v1076, %v1072
    %v1301 = vpack.c.b16 %v1077, %v1073
    %1526 = vmatprep.subr.bf16.mxu0 %v1107
    %1527 = vmatpush1.bf16.msra.mxu0 %v1106
    %1528 = vmatprep.subr.bf16.mxu0 %v1103
    %1529 = vmatpush1.bf16.msra.mxu0 %v1102
    %1530 = vmatprep.subr.bf16.mxu0 %v1099
    %1531 = vmatpush1.bf16.msra.mxu0 %v1098
    %1532 = vmatprep.subr.bf16.mxu0 %v1095
    %1533 = vmatpush1.bf16.msra.mxu0 %v1094
    %1534 = vmatprep.subr.bf16.mxu0 %v1091
    %1535 = vmatpush1.bf16.msra.mxu0 %v1090
    %1536 = vmatprep.subr.bf16.mxu0 %v1087
    %1537 = vmatpush1.bf16.msra.mxu0 %v1086
    %1538 = vmatprep.subr.bf16.mxu0 %v1083
    %1539 = vmatpush1.bf16.msra.mxu0 %v1082
    %1540 = vmatprep.subr.bf16.mxu0 %v1079
    %1541 = vmatpush1.bf16.msra.mxu0 %v1078
    %1542 = vmatprep.subr.bf16.mxu0 %v1139
    %1543 = vmatpush2.bf16.msra.mxu0 %v1138
    %1544 = vmatprep.subr.bf16.mxu0 %v1135
    %1545 = vmatpush2.bf16.msra.mxu0 %v1134
    %1546 = vmatprep.subr.bf16.mxu0 %v1131
    %1547 = vmatpush2.bf16.msra.mxu0 %v1130
    %1548 = vmatprep.subr.bf16.mxu0 %v1127
    %1549 = vmatpush2.bf16.msra.mxu0 %v1126
    %1550 = vmatprep.subr.bf16.mxu0 %v1123
    %1551 = vmatpush2.bf16.msra.mxu0 %v1122
    %1552 = vmatprep.subr.bf16.mxu0 %v1119
    %1553 = vmatpush2.bf16.msra.mxu0 %v1118
    %1554 = vmatprep.subr.bf16.mxu0 %v1115
    %1555 = vmatpush2.bf16.msra.mxu0 %v1114
    %1556 = vmatprep.subr.bf16.mxu0 %v1111
    %1557 = vmatpush2.bf16.msra.mxu0 %v1110
    %1558 = vmatprep.mubr.bf16.mxu0 %v393
    %1559 = vmatmul.mubr.bf16.gmra.mxu0 %v392
    %v1560 = vpop.f32.mrf.mxu0
    %v1561 = vadd.f32 %v364, %v1560
    %v1562 = vpop.f32.mrf.mxu0
    %v1563 = vadd.f32 %v368, %v1562
    %v1564 = vpop.f32.mrf.mxu0
    %v1565 = vpop.f32.mrf.mxu0
    %1566 = vdwg.mxu0
    %1567 = vmatprep.subr.bf16.mxu0 %v1171
    %1568 = vmatpush1.bf16.msra.mxu0 %v1170
    %1569 = vmatprep.subr.bf16.mxu0 %v1167
    %1570 = vmatpush1.bf16.msra.mxu0 %v1166
    %1571 = vmatprep.subr.bf16.mxu0 %v1163
    %1572 = vmatpush1.bf16.msra.mxu0 %v1162
    %1573 = vmatprep.subr.bf16.mxu0 %v1159
    %1574 = vmatpush1.bf16.msra.mxu0 %v1158
    %1575 = vmatprep.subr.bf16.mxu0 %v1155
    %1576 = vmatpush1.bf16.msra.mxu0 %v1154
    %1577 = vmatprep.subr.bf16.mxu0 %v1151
    %1578 = vmatpush1.bf16.msra.mxu0 %v1150
    %1579 = vmatprep.subr.bf16.mxu0 %v1147
    %1580 = vmatpush1.bf16.msra.mxu0 %v1146
    %1581 = vmatprep.subr.bf16.mxu0 %v1143
    %1582 = vmatpush1.bf16.msra.mxu0 %v1142
    %1583 = vmatprep.subr.bf16.mxu0 %v1203
    %1584 = vmatpush2.bf16.msra.mxu0 %v1202
    %1585 = vmatprep.subr.bf16.mxu0 %v1199
    %1586 = vmatpush2.bf16.msra.mxu0 %v1198
    %1587 = vmatprep.subr.bf16.mxu0 %v1195
    %1588 = vmatpush2.bf16.msra.mxu0 %v1194
    %1589 = vmatprep.subr.bf16.mxu0 %v1191
    %1590 = vmatpush2.bf16.msra.mxu0 %v1190
    %1591 = vmatprep.subr.bf16.mxu0 %v1187
    %1592 = vmatpush2.bf16.msra.mxu0 %v1186
    %1593 = vmatprep.subr.bf16.mxu0 %v1183
    %1594 = vmatpush2.bf16.msra.mxu0 %v1182
    %1595 = vmatprep.subr.bf16.mxu0 %v1179
    %1596 = vmatpush2.bf16.msra.mxu0 %v1178
    %1597 = vmatprep.subr.bf16.mxu0 %v1175
    %1598 = vmatpush2.bf16.msra.mxu0 %v1174
    %1599 = vmatprep.mubr.bf16.mxu0 %v395
    %1600 = vmatmul.mubr.bf16.gmra.mxu0 %v394
    %v1601 = vpop.f32.mrf.mxu0
    %v1602 = vadd.f32 %v1561, %v1601
    %v1603 = vpop.f32.mrf.mxu0
    %v1604 = vadd.f32 %v1563, %v1603
    %v1605 = vpop.f32.mrf.mxu0
    %v1606 = vpop.f32.mrf.mxu0
    %1607 = vdwg.mxu0
    %1608 = vmatprep.subr.bf16.mxu0 %v1235
    %1609 = vmatpush1.bf16.msra.mxu0 %v1234
    %1610 = vmatprep.subr.bf16.mxu0 %v1231
    %1611 = vmatpush1.bf16.msra.mxu0 %v1230
    %1612 = vmatprep.subr.bf16.mxu0 %v1227
    %1613 = vmatpush1.bf16.msra.mxu0 %v1226
    %1614 = vmatprep.subr.bf16.mxu0 %v1223
    %1615 = vmatpush1.bf16.msra.mxu0 %v1222
    %1616 = vmatprep.subr.bf16.mxu0 %v1219
    %1617 = vmatpush1.bf16.msra.mxu0 %v1218
    %1618 = vmatprep.subr.bf16.mxu0 %v1215
    %1619 = vmatpush1.bf16.msra.mxu0 %v1214
    %1620 = vmatprep.subr.bf16.mxu0 %v1211
    %1621 = vmatpush1.bf16.msra.mxu0 %v1210
    %1622 = vmatprep.subr.bf16.mxu0 %v1207
    %1623 = vmatpush1.bf16.msra.mxu0 %v1206
    %1624 = vmatprep.subr.bf16.mxu0 %v1267
    %1625 = vmatpush2.bf16.msra.mxu0 %v1266
    %1626 = vmatprep.subr.bf16.mxu0 %v1263
    %1627 = vmatpush2.bf16.msra.mxu0 %v1262
    %1628 = vmatprep.subr.bf16.mxu0 %v1259
    %1629 = vmatpush2.bf16.msra.mxu0 %v1258
    %1630 = vmatprep.subr.bf16.mxu0 %v1255
    %1631 = vmatpush2.bf16.msra.mxu0 %v1254
    %1632 = vmatprep.subr.bf16.mxu0 %v1251
    %1633 = vmatpush2.bf16.msra.mxu0 %v1250
    %1634 = vmatprep.subr.bf16.mxu0 %v1247
    %1635 = vmatpush2.bf16.msra.mxu0 %v1246
    %1636 = vmatprep.subr.bf16.mxu0 %v1243
    %1637 = vmatpush2.bf16.msra.mxu0 %v1242
    %1638 = vmatprep.subr.bf16.mxu0 %v1239
    %1639 = vmatpush2.bf16.msra.mxu0 %v1238
    %1640 = vmatprep.mubr.bf16.mxu0 %v397
    %1641 = vmatmul.mubr.bf16.gmra.mxu0 %v396
    %v1642 = vpop.f32.mrf.mxu0
    %v1643 = vadd.f32 %v1602, %v1642
    %v1644 = vpop.f32.mrf.mxu0
    %v1645 = vadd.f32 %v1604, %v1644
    %v1646 = vpop.f32.mrf.mxu0
    %v1647 = vpop.f32.mrf.mxu0
    %1648 = vdwg.mxu0
    %1649 = vmatprep.subr.bf16.mxu0 %v1299
    %1650 = vmatpush1.bf16.msra.mxu0 %v1298
    %1651 = vmatprep.subr.bf16.mxu0 %v1295
    %1652 = vmatpush1.bf16.msra.mxu0 %v1294
    %1653 = vmatprep.subr.bf16.mxu0 %v1291
    %1654 = vmatpush1.bf16.msra.mxu0 %v1290
    %1655 = vmatprep.subr.bf16.mxu0 %v1287
    %1656 = vmatpush1.bf16.msra.mxu0 %v1286
    %1657 = vmatprep.subr.bf16.mxu0 %v1283
    %1658 = vmatpush1.bf16.msra.mxu0 %v1282
    %1659 = vmatprep.subr.bf16.mxu0 %v1279
    %1660 = vmatpush1.bf16.msra.mxu0 %v1278
    %1661 = vmatprep.subr.bf16.mxu0 %v1275
    %1662 = vmatpush1.bf16.msra.mxu0 %v1274
    %1663 = vmatprep.subr.bf16.mxu0 %v1271
    %1664 = vmatpush1.bf16.msra.mxu0 %v1270
    %1665 = vmatprep.subr.bf16.mxu0 0
    %1666 = vmatpush2.bf16.msra.mxu0 0
    %1667 = vmatprep.subr.bf16.mxu0 0
    %1668 = vmatpush2.bf16.msra.mxu0 0
    %1669 = vmatprep.subr.bf16.mxu0 0
    %1670 = vmatpush2.bf16.msra.mxu0 0
    %1671 = vmatprep.subr.bf16.mxu0 0
    %1672 = vmatpush2.bf16.msra.mxu0 0
    %1673 = vmatprep.subr.bf16.mxu0 0
    %1674 = vmatpush2.bf16.msra.mxu0 0
    %1675 = vmatprep.subr.bf16.mxu0 0
    %1676 = vmatpush2.bf16.msra.mxu0 0
    %1677 = vmatprep.subr.bf16.mxu0 0
    %1678 = vmatpush2.bf16.msra.mxu0 0
    %1679 = vmatprep.subr.bf16.mxu0 0
    %1680 = vmatpush2.bf16.msra.mxu0 0
    %1681 = vmatprep.mubr.bf16.mxu0 0
    %1682 = vmatmul.mubr.bf16.gmra.mxu0 %v398
    %v1683 = vpop.f32.mrf.mxu0
    %v1684 = vadd.f32 %v1643, %v1683
    %v1685 = vpop.f32.mrf.mxu0
    %v1686 = vadd.f32 %v1645, %v1685
    %v1687 = vpop.f32.mrf.mxu0
    %v1688 = vpop.f32.mrf.mxu0
    %1689 = vdwg.mxu0
    %1690 = vmatprep.subr.bf16.mxu0 %v1109
    %1691 = vmatpush1.bf16.msra.mxu0 %v1108
    %1692 = vmatprep.subr.bf16.mxu0 %v1105
    %1693 = vmatpush1.bf16.msra.mxu0 %v1104
    %1694 = vmatprep.subr.bf16.mxu0 %v1101
    %1695 = vmatpush1.bf16.msra.mxu0 %v1100
    %1696 = vmatprep.subr.bf16.mxu0 %v1097
    %1697 = vmatpush1.bf16.msra.mxu0 %v1096
    %1698 = vmatprep.subr.bf16.mxu0 %v1093
    %1699 = vmatpush1.bf16.msra.mxu0 %v1092
    %1700 = vmatprep.subr.bf16.mxu0 %v1089
    %1701 = vmatpush1.bf16.msra.mxu0 %v1088
    %1702 = vmatprep.subr.bf16.mxu0 %v1085
    %1703 = vmatpush1.bf16.msra.mxu0 %v1084
    %1704 = vmatprep.subr.bf16.mxu0 %v1081
    %1705 = vmatpush1.bf16.msra.mxu0 %v1080
    %1706 = vmatprep.subr.bf16.mxu0 %v1141
    %1707 = vmatpush2.bf16.msra.mxu0 %v1140
    %1708 = vmatprep.subr.bf16.mxu0 %v1137
    %1709 = vmatpush2.bf16.msra.mxu0 %v1136
    %1710 = vmatprep.subr.bf16.mxu0 %v1133
    %1711 = vmatpush2.bf16.msra.mxu0 %v1132
    %1712 = vmatprep.subr.bf16.mxu0 %v1129
    %1713 = vmatpush2.bf16.msra.mxu0 %v1128
    %1714 = vmatprep.subr.bf16.mxu0 %v1125
    %1715 = vmatpush2.bf16.msra.mxu0 %v1124
    %1716 = vmatprep.subr.bf16.mxu0 %v1121
    %1717 = vmatpush2.bf16.msra.mxu0 %v1120
    %1718 = vmatprep.subr.bf16.mxu0 %v1117
    %1719 = vmatpush2.bf16.msra.mxu0 %v1116
    %1720 = vmatprep.subr.bf16.mxu0 %v1113
    %1721 = vmatpush2.bf16.msra.mxu0 %v1112
    %1722 = vmatprep.mubr.bf16.mxu0 %v393
    %1723 = vmatmul.mubr.bf16.gmra.mxu0 %v392
    %v1724 = vpop.f32.mrf.mxu0
    %v1725 = vadd.f32 %v372, %v1724
    %v1726 = vpop.f32.mrf.mxu0
    %v1727 = vadd.f32 %v376, %v1726
    %v1728 = vpop.f32.mrf.mxu0
    %v1729 = vpop.f32.mrf.mxu0
    %1730 = vdwg.mxu0
    %1731 = vmatprep.subr.bf16.mxu0 %v1173
    %1732 = vmatpush1.bf16.msra.mxu0 %v1172
    %1733 = vmatprep.subr.bf16.mxu0 %v1169
    %1734 = vmatpush1.bf16.msra.mxu0 %v1168
    %1735 = vmatprep.subr.bf16.mxu0 %v1165
    %1736 = vmatpush1.bf16.msra.mxu0 %v1164
    %1737 = vmatprep.subr.bf16.mxu0 %v1161
    %1738 = vmatpush1.bf16.msra.mxu0 %v1160
    %1739 = vmatprep.subr.bf16.mxu0 %v1157
    %1740 = vmatpush1.bf16.msra.mxu0 %v1156
    %1741 = vmatprep.subr.bf16.mxu0 %v1153
    %1742 = vmatpush1.bf16.msra.mxu0 %v1152
    %1743 = vmatprep.subr.bf16.mxu0 %v1149
    %1744 = vmatpush1.bf16.msra.mxu0 %v1148
    %1745 = vmatprep.subr.bf16.mxu0 %v1145
    %1746 = vmatpush1.bf16.msra.mxu0 %v1144
    %1747 = vmatprep.subr.bf16.mxu0 %v1205
    %1748 = vmatpush2.bf16.msra.mxu0 %v1204
    %1749 = vmatprep.subr.bf16.mxu0 %v1201
    %1750 = vmatpush2.bf16.msra.mxu0 %v1200
    %1751 = vmatprep.subr.bf16.mxu0 %v1197
    %1752 = vmatpush2.bf16.msra.mxu0 %v1196
    %1753 = vmatprep.subr.bf16.mxu0 %v1193
    %1754 = vmatpush2.bf16.msra.mxu0 %v1192
    %1755 = vmatprep.subr.bf16.mxu0 %v1189
    %1756 = vmatpush2.bf16.msra.mxu0 %v1188
    %1757 = vmatprep.subr.bf16.mxu0 %v1185
    %1758 = vmatpush2.bf16.msra.mxu0 %v1184
    %1759 = vmatprep.subr.bf16.mxu0 %v1181
    %1760 = vmatpush2.bf16.msra.mxu0 %v1180
    %1761 = vmatprep.subr.bf16.mxu0 %v1177
    %1762 = vmatpush2.bf16.msra.mxu0 %v1176
    %1763 = vmatprep.mubr.bf16.mxu0 %v395
    %1764 = vmatmul.mubr.bf16.gmra.mxu0 %v394
    %v1765 = vpop.f32.mrf.mxu0
    %v1766 = vadd.f32 %v1725, %v1765
    %v1767 = vpop.f32.mrf.mxu0
    %v1768 = vadd.f32 %v1727, %v1767
    %v1769 = vpop.f32.mrf.mxu0
    %v1770 = vpop.f32.mrf.mxu0
    %1771 = vdwg.mxu0
    %1772 = vmatprep.subr.bf16.mxu0 %v1237
    %1773 = vmatpush1.bf16.msra.mxu0 %v1236
    %1774 = vmatprep.subr.bf16.mxu0 %v1233
    %1775 = vmatpush1.bf16.msra.mxu0 %v1232
    %1776 = vmatprep.subr.bf16.mxu0 %v1229
    %1777 = vmatpush1.bf16.msra.mxu0 %v1228
    %1778 = vmatprep.subr.bf16.mxu0 %v1225
    %1779 = vmatpush1.bf16.msra.mxu0 %v1224
    %1780 = vmatprep.subr.bf16.mxu0 %v1221
    %1781 = vmatpush1.bf16.msra.mxu0 %v1220
    %1782 = vmatprep.subr.bf16.mxu0 %v1217
    %1783 = vmatpush1.bf16.msra.mxu0 %v1216
    %1784 = vmatprep.subr.bf16.mxu0 %v1213
    %1785 = vmatpush1.bf16.msra.mxu0 %v1212
    %1786 = vmatprep.subr.bf16.mxu0 %v1209
    %1787 = vmatpush1.bf16.msra.mxu0 %v1208
    %1788 = vmatprep.subr.bf16.mxu0 %v1269
    %1789 = vmatpush2.bf16.msra.mxu0 %v1268
    %1790 = vmatprep.subr.bf16.mxu0 %v1265
    %1791 = vmatpush2.bf16.msra.mxu0 %v1264
    %1792 = vmatprep.subr.bf16.mxu0 %v1261
    %1793 = vmatpush2.bf16.msra.mxu0 %v1260
    %1794 = vmatprep.subr.bf16.mxu0 %v1257
    %1795 = vmatpush2.bf16.msra.mxu0 %v1256
    %1796 = vmatprep.subr.bf16.mxu0 %v1253
    %1797 = vmatpush2.bf16.msra.mxu0 %v1252
    %1798 = vmatprep.subr.bf16.mxu0 %v1249
    %1799 = vmatpush2.bf16.msra.mxu0 %v1248
    %1800 = vmatprep.subr.bf16.mxu0 %v1245
    %1801 = vmatpush2.bf16.msra.mxu0 %v1244
    %1802 = vmatprep.subr.bf16.mxu0 %v1241
    %1803 = vmatpush2.bf16.msra.mxu0 %v1240
    %1804 = vmatprep.mubr.bf16.mxu0 %v397
    %1805 = vmatmul.mubr.bf16.gmra.mxu0 %v396
    %v1806 = vpop.f32.mrf.mxu0
    %v1807 = vadd.f32 %v1766, %v1806
    %v1808 = vpop.f32.mrf.mxu0
    %v1809 = vadd.f32 %v1768, %v1808
    %v1810 = vpop.f32.mrf.mxu0
    %v1811 = vpop.f32.mrf.mxu0
    %1812 = vdwg.mxu0
    %1813 = vmatprep.subr.bf16.mxu0 %v1301
    %1814 = vmatpush1.bf16.msra.mxu0 %v1300
    %1815 = vmatprep.subr.bf16.mxu0 %v1297
    %1816 = vmatpush1.bf16.msra.mxu0 %v1296
    %1817 = vmatprep.subr.bf16.mxu0 %v1293
    %1818 = vmatpush1.bf16.msra.mxu0 %v1292
    %1819 = vmatprep.subr.bf16.mxu0 %v1289
    %1820 = vmatpush1.bf16.msra.mxu0 %v1288
    %1821 = vmatprep.subr.bf16.mxu0 %v1285
    %1822 = vmatpush1.bf16.msra.mxu0 %v1284
    %1823 = vmatprep.subr.bf16.mxu0 %v1281
    %1824 = vmatpush1.bf16.msra.mxu0 %v1280
    %1825 = vmatprep.subr.bf16.mxu0 %v1277
    %1826 = vmatpush1.bf16.msra.mxu0 %v1276
    %1827 = vmatprep.subr.bf16.mxu0 %v1273
    %1828 = vmatpush1.bf16.msra.mxu0 %v1272
    %1829 = vmatprep.subr.bf16.mxu0 0
    %1830 = vmatpush2.bf16.msra.mxu0 0
    %1831 = vmatprep.subr.bf16.mxu0 0
    %1832 = vmatpush2.bf16.msra.mxu0 0
    %1833 = vmatprep.subr.bf16.mxu0 0
    %1834 = vmatpush2.bf16.msra.mxu0 0
    %1835 = vmatprep.subr.bf16.mxu0 0
    %1836 = vmatpush2.bf16.msra.mxu0 0
    %1837 = vmatprep.subr.bf16.mxu0 0
    %1838 = vmatpush2.bf16.msra.mxu0 0
    %1839 = vmatprep.subr.bf16.mxu0 0
    %1840 = vmatpush2.bf16.msra.mxu0 0
    %1841 = vmatprep.subr.bf16.mxu0 0
    %1842 = vmatpush2.bf16.msra.mxu0 0
    %1843 = vmatprep.subr.bf16.mxu0 0
    %1844 = vmatpush2.bf16.msra.mxu0 0
    %1845 = vmatprep.mubr.bf16.mxu0 0
    %1846 = vmatmul.mubr.bf16.gmra.mxu0 %v398
    %v1847 = vpop.f32.mrf.mxu0
    %v1848 = vadd.f32 %v1807, %v1847
    %v1849 = vpop.f32.mrf.mxu0
    %v1850 = vadd.f32 %v1809, %v1849
    %v1851 = vpop.f32.mrf.mxu0
    %v1852 = vpop.f32.mrf.mxu0
    %1853 = vdwg.mxu0
    %v1854 = vmax.f32 %v1684, 0.0
    %v1855 = vmax.f32 %v1686, 0.0
    %v1856 = vmax.f32 %v1848, 0.0
    %v1857 = vmax.f32 %v1850, 0.0
    %v1858 = vpack.c.bf16 %v1854, %v1854
    %v1859 = vpack.c.bf16 %v1855, %v1855
    %v1860 = vpack.c.bf16 %v1856, %v1856
    %v1861 = vpack.c.bf16 %v1857, %v1857
    %v1862 = vld [vmem:[#allocation8] sm:$0xff]
    %v1863 = vld [vmem:[#allocation8 + $0x8] sm:$0xff]
    %v1864 = vld [vmem:[#allocation8 + $0x10] sm:$0xff]
    %v1865 = vld [vmem:[#allocation8 + $0x18] sm:$0xff]
    %v1866 = vld [vmem:[#allocation8 + $0x20] sm:$0xff]
    %v1867 = vld [vmem:[#allocation8 + $0x28] sm:$0xff]
    %v1868 = vld [vmem:[#allocation8 + $0x30] sm:$0xff]
    %v1869 = vld [vmem:[#allocation8 + $0x38] sm:$0xff]
    %v1870 = vld [vmem:[#allocation8 + $0x40] sm:$0xff]
    %v1871 = vld [vmem:[#allocation8 + $0x48] sm:$0xff]
    %v1872 = vld [vmem:[#allocation8 + $0x50] sm:$0xff]
    %v1873 = vld [vmem:[#allocation8 + $0x58] sm:$0xff]
    %v1874 = vld [vmem:[#allocation8 + $0x60] sm:$0xff]
    %v1875 = vld [vmem:[#allocation8 + $0x68] sm:$0xff]
    %v1876 = vld [vmem:[#allocation8 + $0x70] sm:$0xff]
    %v1877 = vld [vmem:[#allocation8 + $0x78] sm:$0xff]
    %v1878 = vld [vmem:[#allocation8 + $0x80] sm:$0xff]
    %v1879 = vld [vmem:[#allocation8 + $0x88] sm:$0xff]
    %v1880 = vld [vmem:[#allocation8 + $0x90] sm:$0xff]
    %v1881 = vld [vmem:[#allocation8 + $0x98] sm:$0xff]
    %v1882 = vld [vmem:[#allocation8 + $0xa0] sm:$0xff]
    %v1883 = vld [vmem:[#allocation8 + $0xa8] sm:$0xff]
    %v1884 = vld [vmem:[#allocation8 + $0xb0] sm:$0xff]
    %v1885 = vld [vmem:[#allocation8 + $0xb8] sm:$0xff]
    %v1886 = vld [vmem:[#allocation8 + $0xc0] sm:$0xff]
    %v1887 = vld [vmem:[#allocation8 + $0xc8] sm:$0xff]
    %v1888 = vld [vmem:[#allocation8 + $0xd0] sm:$0xff]
    %v1889 = vld [vmem:[#allocation8 + $0xd8] sm:$0xff]
    %v1890 = vld [vmem:[#allocation8 + $0xe0] sm:$0xff]
    %v1891 = vld [vmem:[#allocation8 + $0xe8] sm:$0xff]
    %v1892 = vld [vmem:[#allocation8 + $0xf0] sm:$0xff]
    %v1893 = vld [vmem:[#allocation8 + $0xf8] sm:$0xff]
    %v1894 = vld [vmem:[#allocation8 + $0x100] sm:$0xff]
    %v1895 = vld [vmem:[#allocation8 + $0x108] sm:$0xff]
    %v1896 = vld [vmem:[#allocation8 + $0x110] sm:$0xff]
    %v1897 = vld [vmem:[#allocation8 + $0x118] sm:$0xff]
    %v1898 = vld [vmem:[#allocation8 + $0x120] sm:$0xff]
    %v1899 = vld [vmem:[#allocation8 + $0x128] sm:$0xff]
    %v1900 = vld [vmem:[#allocation8 + $0x130] sm:$0xff]
    %v1901 = vld [vmem:[#allocation8 + $0x138] sm:$0xff]
    %v1902 = vld [vmem:[#allocation8 + $0x140] sm:$0xff]
    %v1903 = vld [vmem:[#allocation8 + $0x148] sm:$0xff]
    %v1904 = vld [vmem:[#allocation8 + $0x150] sm:$0xff]
    %v1905 = vld [vmem:[#allocation8 + $0x158] sm:$0xff]
    %v1906 = vld [vmem:[#allocation8 + $0x160] sm:$0xff]
    %v1907 = vld [vmem:[#allocation8 + $0x168] sm:$0xff]
    %v1908 = vld [vmem:[#allocation8 + $0x170] sm:$0xff]
    %v1909 = vld [vmem:[#allocation8 + $0x178] sm:$0xff]
    %v1910 = vld [vmem:[#allocation8 + $0x180] sm:$0xff]
    %v1911 = vld [vmem:[#allocation8 + $0x188] sm:$0xff]
    %v1912 = vld [vmem:[#allocation8 + $0x190] sm:$0xff]
    %v1913 = vld [vmem:[#allocation8 + $0x198] sm:$0xff]
    %v1914 = vld [vmem:[#allocation8 + $0x1a0] sm:$0xff]
    %v1915 = vld [vmem:[#allocation8 + $0x1a8] sm:$0xff]
    %v1916 = vld [vmem:[#allocation8 + $0x1b0] sm:$0xff]
    %v1917 = vld [vmem:[#allocation8 + $0x1b8] sm:$0xff]
    %v1918 = vld [vmem:[#allocation8 + $0x1c0] sm:$0xff]
    %v1919 = vld [vmem:[#allocation8 + $0x1c8] sm:$0xff]
    %v1920 = vld [vmem:[#allocation8 + $0x1d0] sm:$0xff]
    %v1921 = vld [vmem:[#allocation8 + $0x1d8] sm:$0xff]
    %v1922 = vld [vmem:[#allocation8 + $0x1e0] sm:$0xff]
    %v1923 = vld [vmem:[#allocation8 + $0x1e8] sm:$0xff]
    %v1924 = vld [vmem:[#allocation8 + $0x1f0] sm:$0xff]
    %v1925 = vld [vmem:[#allocation8 + $0x1f8] sm:$0xff]
    %v1926 = vld [vmem:[%s4] sm:$0x3]
    %v1928 = vlaneseq
    %v1929 = vshrl.u32 %v1928, 7
    %v1930 = vsub.s32 0, %v1929
    %v1931 = vrot.slane %v1926, %v1930
    %v1932 = vlaneseq
    %v1933 = vshrl.u32 %v1932, 7
    %v1934 = vsub.s32 1, %v1933
    %v1935 = vrot.slane %v1926, %v1934
    %v2002 = vunpack.c.l.b16 %v1862
    %v2003 = vunpack.c.h.b16 %v1862
    %v2004 = vunpack.c.l.b16 %v1863
    %v2005 = vunpack.c.h.b16 %v1863
    %v2006 = vunpack.c.l.b16 %v1864
    %v2007 = vunpack.c.h.b16 %v1864
    %v2008 = vunpack.c.l.b16 %v1865
    %v2009 = vunpack.c.h.b16 %v1865
    %v2010 = vunpack.c.l.b16 %v1866
    %v2011 = vunpack.c.h.b16 %v1866
    %v2012 = vunpack.c.l.b16 %v1867
    %v2013 = vunpack.c.h.b16 %v1867
    %v2014 = vunpack.c.l.b16 %v1868
    %v2015 = vunpack.c.h.b16 %v1868
    %v2016 = vunpack.c.l.b16 %v1869
    %v2017 = vunpack.c.h.b16 %v1869
    %v2018 = vunpack.c.l.b16 %v1870
    %v2019 = vunpack.c.h.b16 %v1870
    %v2020 = vunpack.c.l.b16 %v1871
    %v2021 = vunpack.c.h.b16 %v1871
    %v2022 = vunpack.c.l.b16 %v1872
    %v2023 = vunpack.c.h.b16 %v1872
    %v2024 = vunpack.c.l.b16 %v1873
    %v2025 = vunpack.c.h.b16 %v1873
    %v2026 = vunpack.c.l.b16 %v1874
    %v2027 = vunpack.c.h.b16 %v1874
    %v2028 = vunpack.c.l.b16 %v1875
    %v2029 = vunpack.c.h.b16 %v1875
    %v2030 = vunpack.c.l.b16 %v1876
    %v2031 = vunpack.c.h.b16 %v1876
    %v2032 = vunpack.c.l.b16 %v1877
    %v2033 = vunpack.c.h.b16 %v1877
    %v2034 = vunpack.c.l.b16 %v1878
    %v2035 = vunpack.c.h.b16 %v1878
    %v2036 = vunpack.c.l.b16 %v1879
    %v2037 = vunpack.c.h.b16 %v1879
    %v2038 = vunpack.c.l.b16 %v1880
    %v2039 = vunpack.c.h.b16 %v1880
    %v2040 = vunpack.c.l.b16 %v1881
    %v2041 = vunpack.c.h.b16 %v1881
    %v2042 = vunpack.c.l.b16 %v1882
    %v2043 = vunpack.c.h.b16 %v1882
    %v2044 = vunpack.c.l.b16 %v1883
    %v2045 = vunpack.c.h.b16 %v1883
    %v2046 = vunpack.c.l.b16 %v1884
    %v2047 = vunpack.c.h.b16 %v1884
    %v2048 = vunpack.c.l.b16 %v1885
    %v2049 = vunpack.c.h.b16 %v1885
    %v2050 = vunpack.c.l.b16 %v1886
    %v2051 = vunpack.c.h.b16 %v1886
    %v2052 = vunpack.c.l.b16 %v1887
    %v2053 = vunpack.c.h.b16 %v1887
    %v2054 = vunpack.c.l.b16 %v1888
    %v2055 = vunpack.c.h.b16 %v1888
    %v2056 = vunpack.c.l.b16 %v1889
    %v2057 = vunpack.c.h.b16 %v1889
    %v2058 = vunpack.c.l.b16 %v1890
    %v2059 = vunpack.c.h.b16 %v1890
    %v2060 = vunpack.c.l.b16 %v1891
    %v2061 = vunpack.c.h.b16 %v1891
    %v2062 = vunpack.c.l.b16 %v1892
    %v2063 = vunpack.c.h.b16 %v1892
    %v2064 = vunpack.c.l.b16 %v1893
    %v2065 = vunpack.c.h.b16 %v1893
    %v2066 = vunpack.c.l.b16 %v1894
    %v2067 = vunpack.c.h.b16 %v1894
    %v2068 = vunpack.c.l.b16 %v1895
    %v2069 = vunpack.c.h.b16 %v1895
    %v2070 = vunpack.c.l.b16 %v1896
    %v2071 = vunpack.c.h.b16 %v1896
    %v2072 = vunpack.c.l.b16 %v1897
    %v2073 = vunpack.c.h.b16 %v1897
    %v2074 = vunpack.c.l.b16 %v1898
    %v2075 = vunpack.c.h.b16 %v1898
    %v2076 = vunpack.c.l.b16 %v1899
    %v2077 = vunpack.c.h.b16 %v1899
    %v2078 = vunpack.c.l.b16 %v1900
    %v2079 = vunpack.c.h.b16 %v1900
    %v2080 = vunpack.c.l.b16 %v1901
    %v2081 = vunpack.c.h.b16 %v1901
    %v2082 = vunpack.c.l.b16 %v1902
    %v2083 = vunpack.c.h.b16 %v1902
    %v2084 = vunpack.c.l.b16 %v1903
    %v2085 = vunpack.c.h.b16 %v1903
    %v2086 = vunpack.c.l.b16 %v1904
    %v2087 = vunpack.c.h.b16 %v1904
    %v2088 = vunpack.c.l.b16 %v1905
    %v2089 = vunpack.c.h.b16 %v1905
    %v2090 = vunpack.c.l.b16 %v1906
    %v2091 = vunpack.c.h.b16 %v1906
    %v2092 = vunpack.c.l.b16 %v1907
    %v2093 = vunpack.c.h.b16 %v1907
    %v2094 = vunpack.c.l.b16 %v1908
    %v2095 = vunpack.c.h.b16 %v1908
    %v2096 = vunpack.c.l.b16 %v1909
    %v2097 = vunpack.c.h.b16 %v1909
    %v2098 = vunpack.c.l.b16 %v1910
    %v2099 = vunpack.c.h.b16 %v1910
    %v2100 = vunpack.c.l.b16 %v1911
    %v2101 = vunpack.c.h.b16 %v1911
    %v2102 = vunpack.c.l.b16 %v1912
    %v2103 = vunpack.c.h.b16 %v1912
    %v2104 = vunpack.c.l.b16 %v1913
    %v2105 = vunpack.c.h.b16 %v1913
    %v2106 = vunpack.c.l.b16 %v1914
    %v2107 = vunpack.c.h.b16 %v1914
    %v2108 = vunpack.c.l.b16 %v1915
    %v2109 = vunpack.c.h.b16 %v1915
    %v2110 = vunpack.c.l.b16 %v1916
    %v2111 = vunpack.c.h.b16 %v1916
    %v2112 = vunpack.c.l.b16 %v1917
    %v2113 = vunpack.c.h.b16 %v1917
    %v2114 = vunpack.c.l.b16 %v1918
    %v2115 = vunpack.c.h.b16 %v1918
    %v2116 = vunpack.c.l.b16 %v1919
    %v2117 = vunpack.c.h.b16 %v1919
    %v2118 = vunpack.c.l.b16 %v1920
    %v2119 = vunpack.c.h.b16 %v1920
    %v2120 = vunpack.c.l.b16 %v1921
    %v2121 = vunpack.c.h.b16 %v1921
    %v2122 = vunpack.c.l.b16 %v1922
    %v2123 = vunpack.c.h.b16 %v1922
    %v2124 = vunpack.c.l.b16 %v1923
    %v2125 = vunpack.c.h.b16 %v1923
    %v2126 = vunpack.c.l.b16 %v1924
    %v2127 = vunpack.c.h.b16 %v1924
    %v2128 = vunpack.c.l.b16 %v1925
    %v2129 = vunpack.c.h.b16 %v1925
    %v2130 = vpack.c.b16 %v2004, %v2002
    %v2131 = vpack.c.b16 %v2005, %v2003
    %v2132 = vpack.c.b16 %v2008, %v2006
    %v2133 = vpack.c.b16 %v2009, %v2007
    %v2134 = vpack.c.b16 %v2012, %v2010
    %v2135 = vpack.c.b16 %v2013, %v2011
    %v2136 = vpack.c.b16 %v2016, %v2014
    %v2137 = vpack.c.b16 %v2017, %v2015
    %v2138 = vpack.c.b16 %v2020, %v2018
    %v2139 = vpack.c.b16 %v2021, %v2019
    %v2140 = vpack.c.b16 %v2024, %v2022
    %v2141 = vpack.c.b16 %v2025, %v2023
    %v2142 = vpack.c.b16 %v2028, %v2026
    %v2143 = vpack.c.b16 %v2029, %v2027
    %v2144 = vpack.c.b16 %v2032, %v2030
    %v2145 = vpack.c.b16 %v2033, %v2031
    %v2146 = vpack.c.b16 %v2036, %v2034
    %v2147 = vpack.c.b16 %v2037, %v2035
    %v2148 = vpack.c.b16 %v2040, %v2038
    %v2149 = vpack.c.b16 %v2041, %v2039
    %v2150 = vpack.c.b16 %v2044, %v2042
    %v2151 = vpack.c.b16 %v2045, %v2043
    %v2152 = vpack.c.b16 %v2048, %v2046
    %v2153 = vpack.c.b16 %v2049, %v2047
    %v2154 = vpack.c.b16 %v2052, %v2050
    %v2155 = vpack.c.b16 %v2053, %v2051
    %v2156 = vpack.c.b16 %v2056, %v2054
    %v2157 = vpack.c.b16 %v2057, %v2055
    %v2158 = vpack.c.b16 %v2060, %v2058
    %v2159 = vpack.c.b16 %v2061, %v2059
    %v2160 = vpack.c.b16 %v2064, %v2062
    %v2161 = vpack.c.b16 %v2065, %v2063
    %v2162 = vpack.c.b16 %v2068, %v2066
    %v2163 = vpack.c.b16 %v2069, %v2067
    %v2164 = vpack.c.b16 %v2072, %v2070
    %v2165 = vpack.c.b16 %v2073, %v2071
    %v2166 = vpack.c.b16 %v2076, %v2074
    %v2167 = vpack.c.b16 %v2077, %v2075
    %v2168 = vpack.c.b16 %v2080, %v2078
    %v2169 = vpack.c.b16 %v2081, %v2079
    %v2170 = vpack.c.b16 %v2084, %v2082
    %v2171 = vpack.c.b16 %v2085, %v2083
    %v2172 = vpack.c.b16 %v2088, %v2086
    %v2173 = vpack.c.b16 %v2089, %v2087
    %v2174 = vpack.c.b16 %v2092, %v2090
    %v2175 = vpack.c.b16 %v2093, %v2091
    %v2176 = vpack.c.b16 %v2096, %v2094
    %v2177 = vpack.c.b16 %v2097, %v2095
    %v2178 = vpack.c.b16 %v2100, %v2098
    %v2179 = vpack.c.b16 %v2101, %v2099
    %v2180 = vpack.c.b16 %v2104, %v2102
    %v2181 = vpack.c.b16 %v2105, %v2103
    %v2182 = vpack.c.b16 %v2108, %v2106
    %v2183 = vpack.c.b16 %v2109, %v2107
    %v2184 = vpack.c.b16 %v2112, %v2110
    %v2185 = vpack.c.b16 %v2113, %v2111
    %v2186 = vpack.c.b16 %v2116, %v2114
    %v2187 = vpack.c.b16 %v2117, %v2115
    %v2188 = vpack.c.b16 %v2120, %v2118
    %v2189 = vpack.c.b16 %v2121, %v2119
    %v2190 = vpack.c.b16 %v2124, %v2122
    %v2191 = vpack.c.b16 %v2125, %v2123
    %v2192 = vpack.c.b16 %v2128, %v2126
    %v2193 = vpack.c.b16 %v2129, %v2127
    %2258 = vmatprep.subr.bf16.mxu0 %v2145
    %2259 = vmatpush1.bf16.msra.mxu0 %v2144
    %2260 = vmatprep.subr.bf16.mxu0 %v2143
    %2261 = vmatpush1.bf16.msra.mxu0 %v2142
    %2262 = vmatprep.subr.bf16.mxu0 %v2141
    %2263 = vmatpush1.bf16.msra.mxu0 %v2140
    %2264 = vmatprep.subr.bf16.mxu0 %v2139
    %2265 = vmatpush1.bf16.msra.mxu0 %v2138
    %2266 = vmatprep.subr.bf16.mxu0 %v2137
    %2267 = vmatpush1.bf16.msra.mxu0 %v2136
    %2268 = vmatprep.subr.bf16.mxu0 %v2135
    %2269 = vmatpush1.bf16.msra.mxu0 %v2134
    %2270 = vmatprep.subr.bf16.mxu0 %v2133
    %2271 = vmatpush1.bf16.msra.mxu0 %v2132
    %2272 = vmatprep.subr.bf16.mxu0 %v2131
    %2273 = vmatpush1.bf16.msra.mxu0 %v2130
    %2274 = vmatprep.subr.bf16.mxu0 %v2161
    %2275 = vmatpush2.bf16.msra.mxu0 %v2160
    %2276 = vmatprep.subr.bf16.mxu0 %v2159
    %2277 = vmatpush2.bf16.msra.mxu0 %v2158
    %2278 = vmatprep.subr.bf16.mxu0 %v2157
    %2279 = vmatpush2.bf16.msra.mxu0 %v2156
    %2280 = vmatprep.subr.bf16.mxu0 %v2155
    %2281 = vmatpush2.bf16.msra.mxu0 %v2154
    %2282 = vmatprep.subr.bf16.mxu0 %v2153
    %2283 = vmatpush2.bf16.msra.mxu0 %v2152
    %2284 = vmatprep.subr.bf16.mxu0 %v2151
    %2285 = vmatpush2.bf16.msra.mxu0 %v2150
    %2286 = vmatprep.subr.bf16.mxu0 %v2149
    %2287 = vmatpush2.bf16.msra.mxu0 %v2148
    %2288 = vmatprep.subr.bf16.mxu0 %v2147
    %2289 = vmatpush2.bf16.msra.mxu0 %v2146
    %2290 = vmatprep.mubr.bf16.mxu0 %v1859
    %2291 = vmatmul.mubr.bf16.gmra.mxu0 %v1858
    %v2292 = vpop.f32.mrf.mxu0
    %v2293 = vadd.f32 %v1931, %v2292
    %v2294 = vpop.f32.mrf.mxu0
    %v2295 = vadd.f32 %v1935, %v2294
    %v2296 = vpop.f32.mrf.mxu0
    %v2297 = vpop.f32.mrf.mxu0
    %2298 = vdwg.mxu0
    %2299 = vmatprep.subr.bf16.mxu0 %v2177
    %2300 = vmatpush1.bf16.msra.mxu0 %v2176
    %2301 = vmatprep.subr.bf16.mxu0 %v2175
    %2302 = vmatpush1.bf16.msra.mxu0 %v2174
    %2303 = vmatprep.subr.bf16.mxu0 %v2173
    %2304 = vmatpush1.bf16.msra.mxu0 %v2172
    %2305 = vmatprep.subr.bf16.mxu0 %v2171
    %2306 = vmatpush1.bf16.msra.mxu0 %v2170
    %2307 = vmatprep.subr.bf16.mxu0 %v2169
    %2308 = vmatpush1.bf16.msra.mxu0 %v2168
    %2309 = vmatprep.subr.bf16.mxu0 %v2167
    %2310 = vmatpush1.bf16.msra.mxu0 %v2166
    %2311 = vmatprep.subr.bf16.mxu0 %v2165
    %2312 = vmatpush1.bf16.msra.mxu0 %v2164
    %2313 = vmatprep.subr.bf16.mxu0 %v2163
    %2314 = vmatpush1.bf16.msra.mxu0 %v2162
    %2315 = vmatprep.subr.bf16.mxu0 %v2193
    %2316 = vmatpush2.bf16.msra.mxu0 %v2192
    %2317 = vmatprep.subr.bf16.mxu0 %v2191
    %2318 = vmatpush2.bf16.msra.mxu0 %v2190
    %2319 = vmatprep.subr.bf16.mxu0 %v2189
    %2320 = vmatpush2.bf16.msra.mxu0 %v2188
    %2321 = vmatprep.subr.bf16.mxu0 %v2187
    %2322 = vmatpush2.bf16.msra.mxu0 %v2186
    %2323 = vmatprep.subr.bf16.mxu0 %v2185
    %2324 = vmatpush2.bf16.msra.mxu0 %v2184
    %2325 = vmatprep.subr.bf16.mxu0 %v2183
    %2326 = vmatpush2.bf16.msra.mxu0 %v2182
    %2327 = vmatprep.subr.bf16.mxu0 %v2181
    %2328 = vmatpush2.bf16.msra.mxu0 %v2180
    %2329 = vmatprep.subr.bf16.mxu0 %v2179
    %2330 = vmatpush2.bf16.msra.mxu0 %v2178
    %2331 = vmatprep.mubr.bf16.mxu0 %v1861
    %2332 = vmatmul.mubr.bf16.gmra.mxu0 %v1860
    %v2333 = vpop.f32.mrf.mxu0
    %v2334 = vadd.f32 %v2293, %v2333
    %v2335 = vpop.f32.mrf.mxu0
    %v2336 = vadd.f32 %v2295, %v2335
    %v2337 = vpop.f32.mrf.mxu0
    %v2338 = vpop.f32.mrf.mxu0
    %2339 = vdwg.mxu0
    %v2340 = vmax.f32 %v2334, 0.0
    %v2341 = vmax.f32 %v2336, 0.0
    %v2342 = vpack.c.bf16 %v2340, %v2340
    %v2343 = vpack.c.bf16 %v2341, %v2341
    %v2344 = vld [vmem:[#allocation10] sm:$0xf]
    %v2345 = vld [vmem:[#allocation10 + $0x4] sm:$0xf]
    %v2346 = vld [vmem:[#allocation10 + $0x8] sm:$0xf]
    %v2347 = vld [vmem:[#allocation10 + $0xc] sm:$0xf]
    %v2348 = vld [vmem:[#allocation10 + $0x10] sm:$0xf]
    %v2349 = vld [vmem:[#allocation10 + $0x14] sm:$0xf]
    %v2350 = vld [vmem:[#allocation10 + $0x18] sm:$0xf]
    %v2351 = vld [vmem:[#allocation10 + $0x1c] sm:$0xf]
    %v2352 = vld [vmem:[#allocation10 + $0x20] sm:$0xf]
    %v2353 = vld [vmem:[#allocation10 + $0x24] sm:$0xf]
    %v2354 = vld [vmem:[#allocation10 + $0x28] sm:$0xf]
    %v2355 = vld [vmem:[#allocation10 + $0x2c] sm:$0xf]
    %v2356 = vld [vmem:[#allocation10 + $0x30] sm:$0xf]
    %v2357 = vld [vmem:[#allocation10 + $0x34] sm:$0xf]
    %v2358 = vld [vmem:[#allocation10 + $0x38] sm:$0xf]
    %v2359 = vld [vmem:[#allocation10 + $0x3c] sm:$0xf]
    %v2360 = vld [vmem:[#allocation10 + $0x40] sm:$0xf]
    %v2361 = vld [vmem:[#allocation10 + $0x44] sm:$0xf]
    %v2362 = vld [vmem:[#allocation10 + $0x48] sm:$0xf]
    %v2363 = vld [vmem:[#allocation10 + $0x4c] sm:$0xf]
    %v2364 = vld [vmem:[#allocation10 + $0x50] sm:$0xf]
    %v2365 = vld [vmem:[#allocation10 + $0x54] sm:$0xf]
    %v2366 = vld [vmem:[#allocation10 + $0x58] sm:$0xf]
    %v2367 = vld [vmem:[#allocation10 + $0x5c] sm:$0xf]
    %v2368 = vld [vmem:[#allocation10 + $0x60] sm:$0xf]
    %v2369 = vld [vmem:[#allocation10 + $0x64] sm:$0xf]
    %v2370 = vld [vmem:[#allocation10 + $0x68] sm:$0xf]
    %v2371 = vld [vmem:[#allocation10 + $0x6c] sm:$0xf]
    %v2372 = vld [vmem:[#allocation10 + $0x70] sm:$0xf]
    %v2373 = vld [vmem:[#allocation10 + $0x74] sm:$0xf]
    %v2374 = vld [vmem:[#allocation10 + $0x78] sm:$0xf]
    %v2375 = vld [vmem:[#allocation10 + $0x7c] sm:$0xf]
    %v2376 = vld [vmem:[%s6] sm:$0x1]
    %v2378 = vlaneseq
    %v2379 = vshrl.u32 %v2378, 7
    %v2380 = vsub.s32 0, %v2379
    %v2381 = vrot.slane %v2376, %v2380
    %v2415 = vunpack.c.l.b16 %v2344
    %v2416 = vunpack.c.l.b16 %v2345
    %v2417 = vunpack.c.l.b16 %v2346
    %v2418 = vunpack.c.l.b16 %v2347
    %v2419 = vunpack.c.l.b16 %v2348
    %v2420 = vunpack.c.l.b16 %v2349
    %v2421 = vunpack.c.l.b16 %v2350
    %v2422 = vunpack.c.l.b16 %v2351
    %v2423 = vunpack.c.l.b16 %v2352
    %v2424 = vunpack.c.l.b16 %v2353
    %v2425 = vunpack.c.l.b16 %v2354
    %v2426 = vunpack.c.l.b16 %v2355
    %v2427 = vunpack.c.l.b16 %v2356
    %v2428 = vunpack.c.l.b16 %v2357
    %v2429 = vunpack.c.l.b16 %v2358
    %v2430 = vunpack.c.l.b16 %v2359
    %v2431 = vunpack.c.l.b16 %v2360
    %v2432 = vunpack.c.l.b16 %v2361
    %v2433 = vunpack.c.l.b16 %v2362
    %v2434 = vunpack.c.l.b16 %v2363
    %v2435 = vunpack.c.l.b16 %v2364
    %v2436 = vunpack.c.l.b16 %v2365
    %v2437 = vunpack.c.l.b16 %v2366
    %v2438 = vunpack.c.l.b16 %v2367
    %v2439 = vunpack.c.l.b16 %v2368
    %v2440 = vunpack.c.l.b16 %v2369
    %v2441 = vunpack.c.l.b16 %v2370
    %v2442 = vunpack.c.l.b16 %v2371
    %v2443 = vunpack.c.l.b16 %v2372
    %v2444 = vunpack.c.l.b16 %v2373
    %v2445 = vunpack.c.l.b16 %v2374
    %v2446 = vunpack.c.l.b16 %v2375
    %v2447 = vpack.c.b16 %v2416, %v2415
    %v2448 = vpack.c.b16 %v2418, %v2417
    %v2449 = vpack.c.b16 %v2420, %v2419
    %v2450 = vpack.c.b16 %v2422, %v2421
    %v2451 = vpack.c.b16 %v2424, %v2423
    %v2452 = vpack.c.b16 %v2426, %v2425
    %v2453 = vpack.c.b16 %v2428, %v2427
    %v2454 = vpack.c.b16 %v2430, %v2429
    %v2455 = vpack.c.b16 %v2432, %v2431
    %v2456 = vpack.c.b16 %v2434, %v2433
    %v2457 = vpack.c.b16 %v2436, %v2435
    %v2458 = vpack.c.b16 %v2438, %v2437
    %v2459 = vpack.c.b16 %v2440, %v2439
    %v2460 = vpack.c.b16 %v2442, %v2441
    %v2461 = vpack.c.b16 %v2444, %v2443
    %v2462 = vpack.c.b16 %v2446, %v2445
    %2479 = vmatprep.subr.bf16.mxu0 0
    %2480 = vmatpush1.bf16.msra.mxu0 %v2454
    %2481 = vmatprep.subr.bf16.mxu0 0
    %2482 = vmatpush1.bf16.msra.mxu0 %v2453
    %2483 = vmatprep.subr.bf16.mxu0 0
    %2484 = vmatpush1.bf16.msra.mxu0 %v2452
    %2485 = vmatprep.subr.bf16.mxu0 0
    %2486 = vmatpush1.bf16.msra.mxu0 %v2451
    %2487 = vmatprep.subr.bf16.mxu0 0
    %2488 = vmatpush1.bf16.msra.mxu0 %v2450
    %2489 = vmatprep.subr.bf16.mxu0 0
    %2490 = vmatpush1.bf16.msra.mxu0 %v2449
    %2491 = vmatprep.subr.bf16.mxu0 0
    %2492 = vmatpush1.bf16.msra.mxu0 %v2448
    %2493 = vmatprep.subr.bf16.mxu0 0
    %2494 = vmatpush1.bf16.msra.mxu0 %v2447
    %2495 = vmatprep.subr.bf16.mxu0 0
    %2496 = vmatpush2.bf16.msra.mxu0 %v2462
    %2497 = vmatprep.subr.bf16.mxu0 0
    %2498 = vmatpush2.bf16.msra.mxu0 %v2461
    %2499 = vmatprep.subr.bf16.mxu0 0
    %2500 = vmatpush2.bf16.msra.mxu0 %v2460
    %2501 = vmatprep.subr.bf16.mxu0 0
    %2502 = vmatpush2.bf16.msra.mxu0 %v2459
    %2503 = vmatprep.subr.bf16.mxu0 0
    %2504 = vmatpush2.bf16.msra.mxu0 %v2458
    %2505 = vmatprep.subr.bf16.mxu0 0
    %2506 = vmatpush2.bf16.msra.mxu0 %v2457
    %2507 = vmatprep.subr.bf16.mxu0 0
    %2508 = vmatpush2.bf16.msra.mxu0 %v2456
    %2509 = vmatprep.subr.bf16.mxu0 0
    %2510 = vmatpush2.bf16.msra.mxu0 %v2455
    %2511 = vmatprep.mubr.bf16.mxu0 %v2343
    %2512 = vmatmul.mubr.bf16.gmra.mxu0 %v2342
    %v2513 = vpop.f32.mrf.mxu0
    %v2514 = vadd.f32 %v2381, %v2513
    %v2515 = vpop.f32.mrf.mxu0
    %v2516 = vpop.f32.mrf.mxu0
    %v2517 = vpop.f32.mrf.mxu0
    %2518 = vdwg.mxu0
    %v2519 = vmax.f32 %v2514, 0.0
    %v2520 = vpack.c.bf16 %v2519, %v2519
    %v2521 = vld [vmem:[#allocation11] sm:$0xf]
    %v2522 = vld [vmem:[#allocation11 + $0x4] sm:$0xf]
    %v2523 = vld [vmem:[#allocation11 + $0x8] sm:$0xf]
    %v2524 = vld [vmem:[#allocation11 + $0xc] sm:$0xf]
    %v2525 = vld [vmem:[#allocation11 + $0x10] sm:$0xf]
    %v2526 = vld [vmem:[#allocation11 + $0x14] sm:$0xf]
    %v2527 = vld [vmem:[#allocation11 + $0x18] sm:$0xf]
    %v2528 = vld [vmem:[#allocation11 + $0x1c] sm:$0xf]
    %v2529 = vld [vmem:[#allocation11 + $0x20] sm:$0xf]
    %v2530 = vld [vmem:[#allocation11 + $0x24] sm:$0xf]
    %v2531 = vld [vmem:[#allocation11 + $0x28] sm:$0xf]
    %v2532 = vld [vmem:[#allocation11 + $0x2c] sm:$0xf]
    %v2533 = vld [vmem:[#allocation11 + $0x30] sm:$0xf]
    %v2534 = vld [vmem:[#allocation11 + $0x34] sm:$0xf]
    %v2535 = vld [vmem:[#allocation11 + $0x38] sm:$0xf]
    %v2536 = vld [vmem:[#allocation11 + $0x3c] sm:$0xf]
    %v2537 = vld [vmem:[%s8] sm:$0x1]
    %v2539 = vlaneseq
    %v2540 = vshrl.u32 %v2539, 7
    %v2541 = vsub.s32 0, %v2540
    %v2542 = vrot.slane %v2537, %v2541
    %v2560 = vunpack.c.l.b16 %v2521
    %v2561 = vunpack.c.l.b16 %v2522
    %v2562 = vunpack.c.l.b16 %v2523
    %v2563 = vunpack.c.l.b16 %v2524
    %v2564 = vunpack.c.l.b16 %v2525
    %v2565 = vunpack.c.l.b16 %v2526
    %v2566 = vunpack.c.l.b16 %v2527
    %v2567 = vunpack.c.l.b16 %v2528
    %v2568 = vunpack.c.l.b16 %v2529
    %v2569 = vunpack.c.l.b16 %v2530
    %v2570 = vunpack.c.l.b16 %v2531
    %v2571 = vunpack.c.l.b16 %v2532
    %v2572 = vunpack.c.l.b16 %v2533
    %v2573 = vunpack.c.l.b16 %v2534
    %v2574 = vunpack.c.l.b16 %v2535
    %v2575 = vunpack.c.l.b16 %v2536
    %v2576 = vpack.c.b16 %v2561, %v2560
    %v2577 = vpack.c.b16 %v2563, %v2562
    %v2578 = vpack.c.b16 %v2565, %v2564
    %v2579 = vpack.c.b16 %v2567, %v2566
    %v2580 = vpack.c.b16 %v2569, %v2568
    %v2581 = vpack.c.b16 %v2571, %v2570
    %v2582 = vpack.c.b16 %v2573, %v2572
    %v2583 = vpack.c.b16 %v2575, %v2574
    %2592 = vmatprep.subr.bf16.mxu0 0
    %2593 = vmatpush1.bf16.msra.mxu0 %v2583
    %2594 = vmatprep.subr.bf16.mxu0 0
    %2595 = vmatpush1.bf16.msra.mxu0 %v2582
    %2596 = vmatprep.subr.bf16.mxu0 0
    %2597 = vmatpush1.bf16.msra.mxu0 %v2581
    %2598 = vmatprep.subr.bf16.mxu0 0
    %2599 = vmatpush1.bf16.msra.mxu0 %v2580
    %2600 = vmatprep.subr.bf16.mxu0 0
    %2601 = vmatpush1.bf16.msra.mxu0 %v2579
    %2602 = vmatprep.subr.bf16.mxu0 0
    %2603 = vmatpush1.bf16.msra.mxu0 %v2578
    %2604 = vmatprep.subr.bf16.mxu0 0
    %2605 = vmatpush1.bf16.msra.mxu0 %v2577
    %2606 = vmatprep.subr.bf16.mxu0 0
    %2607 = vmatpush1.bf16.msra.mxu0 %v2576
    %2608 = vmatprep.subr.bf16.mxu0 0
    %2609 = vmatpush2.bf16.msra.mxu0 0
    %2610 = vmatprep.subr.bf16.mxu0 0
    %2611 = vmatpush2.bf16.msra.mxu0 0
    %2612 = vmatprep.subr.bf16.mxu0 0
    %2613 = vmatpush2.bf16.msra.mxu0 0
    %2614 = vmatprep.subr.bf16.mxu0 0
    %2615 = vmatpush2.bf16.msra.mxu0 0
    %2616 = vmatprep.subr.bf16.mxu0 0
    %2617 = vmatpush2.bf16.msra.mxu0 0
    %2618 = vmatprep.subr.bf16.mxu0 0
    %2619 = vmatpush2.bf16.msra.mxu0 0
    %2620 = vmatprep.subr.bf16.mxu0 0
    %2621 = vmatpush2.bf16.msra.mxu0 0
    %2622 = vmatprep.subr.bf16.mxu0 0
    %2623 = vmatpush2.bf16.msra.mxu0 0
    %2624 = vmatprep.mubr.bf16.mxu0 0
    %2625 = vmatmul.mubr.bf16.gmra.mxu0 %v2520
    %v2626 = vpop.f32.mrf.mxu0
    %v2627 = vadd.f32 %v2542, %v2626
    %v2628 = vpop.f32.mrf.mxu0
    %v2629 = vpop.f32.mrf.mxu0
    %v2630 = vpop.f32.mrf.mxu0
    %2631 = vdwg.mxu0
    %v2632 = vmax.f32 %v2627, 0.0
    %v2633 = vpack.c.bf16 %v2632, %v2632
    %v2634 = vld [vmem:[#allocation13] sm:$0xf]
    %v2635 = vld [vmem:[#allocation13 + $0x4] sm:$0xf]
    %v2636 = vld [vmem:[#allocation13 + $0x8] sm:$0xf]
    %v2637 = vld [vmem:[#allocation13 + $0xc] sm:$0xf]
    %v2638 = vld [vmem:[#allocation13 + $0x10] sm:$0xf]
    %v2639 = vld [vmem:[#allocation13 + $0x14] sm:$0xf]
    %v2640 = vld [vmem:[#allocation13 + $0x18] sm:$0xf]
    %v2641 = vld [vmem:[#allocation13 + $0x1c] sm:$0xf]
    %v2642 = vld [vmem:[#allocation13 + $0x20] sm:$0xf]
    %v2643 = vld [vmem:[#allocation13 + $0x24] sm:$0xf]
    %v2644 = vld [vmem:[#allocation13 + $0x28] sm:$0xf]
    %v2645 = vld [vmem:[#allocation13 + $0x2c] sm:$0xf]
    %v2646 = vld [vmem:[#allocation13 + $0x30] sm:$0xf]
    %v2647 = vld [vmem:[#allocation13 + $0x34] sm:$0xf]
    %v2648 = vld [vmem:[#allocation13 + $0x38] sm:$0xf]
    %v2649 = vld [vmem:[#allocation13 + $0x3c] sm:$0xf]
    %v2650 = vld [vmem:[%s10] sm:$0x1]
    %v2652 = vlaneseq
    %v2653 = vshrl.u32 %v2652, 7
    %v2654 = vsub.s32 0, %v2653
    %v2655 = vrot.slane %v2650, %v2654
    %v2673 = vunpack.c.l.b16 %v2634
    %v2674 = vunpack.c.l.b16 %v2635
    %v2675 = vunpack.c.l.b16 %v2636
    %v2676 = vunpack.c.l.b16 %v2637
    %v2677 = vunpack.c.l.b16 %v2638
    %v2678 = vunpack.c.l.b16 %v2639
    %v2679 = vunpack.c.l.b16 %v2640
    %v2680 = vunpack.c.l.b16 %v2641
    %v2681 = vunpack.c.l.b16 %v2642
    %v2682 = vunpack.c.l.b16 %v2643
    %v2683 = vunpack.c.l.b16 %v2644
    %v2684 = vunpack.c.l.b16 %v2645
    %v2685 = vunpack.c.l.b16 %v2646
    %v2686 = vunpack.c.l.b16 %v2647
    %v2687 = vunpack.c.l.b16 %v2648
    %v2688 = vunpack.c.l.b16 %v2649
    %v2689 = vpack.c.b16 %v2674, %v2673
    %v2690 = vpack.c.b16 %v2676, %v2675
    %v2691 = vpack.c.b16 %v2678, %v2677
    %v2692 = vpack.c.b16 %v2680, %v2679
    %v2693 = vpack.c.b16 %v2682, %v2681
    %v2694 = vpack.c.b16 %v2684, %v2683
    %v2695 = vpack.c.b16 %v2686, %v2685
    %v2696 = vpack.c.b16 %v2688, %v2687
    %2705 = vmatprep.subr.bf16.mxu0 0
    %2706 = vmatpush1.bf16.msra.mxu0 %v2696
    %2707 = vmatprep.subr.bf16.mxu0 0
    %2708 = vmatpush1.bf16.msra.mxu0 %v2695
    %2709 = vmatprep.subr.bf16.mxu0 0
    %2710 = vmatpush1.bf16.msra.mxu0 %v2694
    %2711 = vmatprep.subr.bf16.mxu0 0
    %2712 = vmatpush1.bf16.msra.mxu0 %v2693
    %2713 = vmatprep.subr.bf16.mxu0 0
    %2714 = vmatpush1.bf16.msra.mxu0 %v2692
    %2715 = vmatprep.subr.bf16.mxu0 0
    %2716 = vmatpush1.bf16.msra.mxu0 %v2691
    %2717 = vmatprep.subr.bf16.mxu0 0
    %2718 = vmatpush1.bf16.msra.mxu0 %v2690
    %2719 = vmatprep.subr.bf16.mxu0 0
    %2720 = vmatpush1.bf16.msra.mxu0 %v2689
    %2721 = vmatprep.subr.bf16.mxu0 0
    %2722 = vmatpush2.bf16.msra.mxu0 0
    %2723 = vmatprep.subr.bf16.mxu0 0
    %2724 = vmatpush2.bf16.msra.mxu0 0
    %2725 = vmatprep.subr.bf16.mxu0 0
    %2726 = vmatpush2.bf16.msra.mxu0 0
    %2727 = vmatprep.subr.bf16.mxu0 0
    %2728 = vmatpush2.bf16.msra.mxu0 0
    %2729 = vmatprep.subr.bf16.mxu0 0
    %2730 = vmatpush2.bf16.msra.mxu0 0
    %2731 = vmatprep.subr.bf16.mxu0 0
    %2732 = vmatpush2.bf16.msra.mxu0 0
    %2733 = vmatprep.subr.bf16.mxu0 0
    %2734 = vmatpush2.bf16.msra.mxu0 0
    %2735 = vmatprep.subr.bf16.mxu0 0
    %2736 = vmatpush2.bf16.msra.mxu0 0
    %2737 = vmatprep.mubr.bf16.mxu0 0
    %2738 = vmatmul.mubr.bf16.gmra.mxu0 %v2633
    %v2739 = vpop.f32.mrf.mxu0
    %v2740 = vadd.f32 %v2655, %v2739
    %v2741 = vpop.f32.mrf.mxu0
    %v2742 = vpop.f32.mrf.mxu0
    %v2743 = vpop.f32.mrf.mxu0
    %2744 = vdwg.mxu0
    %2745 = vst [vmem:[#allocation14] sm:$0xff] %v2740
    // Predicated region
    $region74: #{tpu_custom_call.1} parent=1 // pred_check
      _
    $region75: #{tpu_custom_call.1} parent=1 // pred_check_branch
      %2747 = sbr.rel (0) target = $region77
    $region76: #{tpu_custom_call.1} parent=1 // pred_region
      %s2749 = ssub.s32 128, 128
      %2750 = vsyncadd [#allocation4], %s2749
      %s2752 = sshll.u32 [#allocation14], 4
      %s2753 = int_to_ptr.vmem [resolvable:$true] %s2752
      %2755 = dma.vmem_to_hbm [thread:$0]  %s2753, 128, %s11, [#allocation4]
    $region77: #{tpu_custom_call.1} parent=1 // pred_fallthru
      _
    // Predicated region
    $region78: #{tpu_custom_call.1} parent=1 // pred_check
      _
    $region79: #{tpu_custom_call.1} parent=1 // pred_check_branch
      %2757 = sbr.rel (0) target = $region81
    $region80: #{tpu_custom_call.1} parent=1 // pred_region
      %2758 = dma.done [#allocation4], 128
    $region81: #{tpu_custom_call.1} parent=1 // pred_fallthru
      _
    %2759 = vsyncpa [#allocation3], 1
    %2760 = vsyncpa [#allocation6], 1
    %2761 = vsyncpa [#allocation9], 1
    %2762 = vsyncpa [#allocation12], 1
    %2763 = vsyncpa [#allocation4], 1

</llo_original>
